<compile_context>
chip_gen: v7x
topology: tpu7x:2x2x1
jax: 0.10.0
libtpu: 0.0.40
codegen_flags: <defaults>
</compile_context>

<pallas_src>
import jax
import jax.numpy as jnp
from jax.experimental import pallas as pl
from jax.experimental.pallas import tpu as pltpu

HID = 256      # fc1..fc7 width, padded up from 250
OUT_PAD = 128  # fc8 output width, padded up from 3 (lane-dense store)


def _make_kernel(num_materials):
    """Build the kernel with the true (unpadded) material count baked in."""

    def fnn_kernel(
        xt_ref,      # (bt, 4)            thickness input tile
        m1_ref,      # (bt, 1) int32      material-1 ids
        m2_ref,      # (bt, 1) int32      material-2 ids
        wth_ref,     # (4, 128)           fc_thickness weight
        bth_ref,     # (1, 128)           fc_thickness bias
        w1t_ref,     # (128, HID)         fc1 weight slice acting on thickness part
        w1m_ref,     # (2M_pad, HID)      fc1 weights with embedding table folded in
        b1_ref,      # (1, HID)           fc1 bias
        wmid_ref,    # (6, HID, HID)      fc2..fc7 weights stacked
        bmid_ref,    # (6, 1, HID)        fc2..fc7 biases stacked
        w8_ref,      # (HID, OUT_PAD)     fc8 weight (zero-padded)
        b8_ref,      # (1, OUT_PAD)       fc8 bias (zero-padded)
        out_ref,     # (bt, OUT_PAD)
    ):
        f32 = jnp.float32
        bt = xt_ref.shape[0]

        # x_thickness = relu(fc_thickness(x_thickness))
        h_th = jnp.dot(xt_ref[...], wth_ref[...], preferred_element_type=f32)
        h_th = jnp.maximum(h_th + bth_ref[...], 0.0)

        # Embedding lookup as a one-hot matmul against the folded fc1 weights:
        #   onehot @ [T @ W1e1 ; T @ W1e2] == T[idx1] @ W1e1 + T[idx2] @ W1e2
        # Columns [0, M) select material-1, columns [M, 2M) select material-2;
        # columns >= 2M (padding) are never set since ids < M.
        kdim = w1m_ref.shape[0]          # padded 2 * num_materials
        cols = jax.lax.broadcasted_iota(jnp.int32, (bt, kdim), 1)
        onehot = (
            (cols == m1_ref[...]) | (cols == m2_ref[...] + num_materials)
        ).astype(f32)

        # x = relu(fc1(cat([h_th, e1, e2], dim=1)))  (concat as split matmul)
        x = (
            jnp.dot(h_th, w1t_ref[...], preferred_element_type=f32)
            + jnp.dot(onehot, w1m_ref[...], preferred_element_type=f32)
            + b1_ref[...]
        )
        x = jnp.maximum(x, 0.0)

        # fc2 .. fc7 (HID -> HID with relu), statically unrolled
        for i in range(wmid_ref.shape[0]):
            x = jnp.dot(x, wmid_ref[i], preferred_element_type=f32) + bmid_ref[i]
            x = jnp.maximum(x, 0.0)

        # fc8 (no activation); lane-dense padded store
        out_ref[...] = (
            jnp.dot(x, w8_ref[...], preferred_element_type=f32) + b8_ref[...]
        ).astype(out_ref.dtype)

    return fnn_kernel


def make_params(key, num_materials, embedding_dim):
    """Deterministic synthetic parameters (shapes match the PyTorch module)."""
    ks = jax.random.split(key, 16)
    E = embedding_dim
    p = {}
    p["emb_table"] = jax.random.normal(ks[0], (num_materials, E), jnp.float32) * 0.1
    p["w_th"] = jax.random.normal(ks[1], (4, 128), jnp.float32) * 0.1
    p["b_th"] = jax.random.normal(ks[2], (1, 128), jnp.float32) * 0.01
    # fc1: in = 128 + 2E, out = 250; stored pre-split along the input axis
    p["w1_th"] = jax.random.normal(ks[3], (128, 250), jnp.float32) * 0.05
    p["w1_e1"] = jax.random.normal(ks[4], (E, 250), jnp.float32) * 0.05
    p["w1_e2"] = jax.random.normal(ks[5], (E, 250), jnp.float32) * 0.05
    p["b1"] = jax.random.normal(ks[6], (1, 250), jnp.float32) * 0.01
    # fc2..fc7 stacked
    p["w_mid"] = jax.random.normal(ks[7], (6, 250, 250), jnp.float32) * 0.05
    p["b_mid"] = jax.random.normal(ks[8], (6, 1, 250), jnp.float32) * 0.01
    # fc8
    p["w8"] = jax.random.normal(ks[9], (250, 3), jnp.float32) * 0.05
    p["b8"] = jax.random.normal(ks[10], (1, 3), jnp.float32) * 0.01
    return p


def _round_up(x, m):
    return (x + m - 1) // m * m


def _prepare_kernel_params(p):
    """Fold the embedding table into fc1 and zero-pad to MXU-friendly shapes.

    All padding is exact: padded hidden units / folded rows have zero weight
    and zero bias, so they stay 0 through every relu and contribute nothing
    downstream.
    """
    h = p["w_mid"].shape[-1]          # 250

    def pad_last(w, n):
        return jnp.pad(w, [(0, 0)] * (w.ndim - 1) + [(0, n - w.shape[-1])])

    # (2*num_materials, 250): row i of the first half is emb_table[i] @ W1_e1,
    # row i of the second half is emb_table[i] @ W1_e2.
    w1_m = jnp.concatenate(
        [p["emb_table"] @ p["w1_e1"], p["emb_table"] @ p["w1_e2"]], axis=0
    )
    rows = w1_m.shape[0]
    rows_pad = _round_up(rows, 8)     # sublane-align the folded-embedding rows

    return {
        "w_th": p["w_th"],
        "b_th": p["b_th"],
        "w1_th": pad_last(p["w1_th"], HID),
        "w1_m": jnp.pad(w1_m, ((0, rows_pad - rows), (0, HID - h))),
        "b1": pad_last(p["b1"], HID),
        "w_mid": jnp.pad(p["w_mid"], ((0, 0), (0, HID - h), (0, HID - h))),
        "b_mid": pad_last(p["b_mid"], HID),
        "w8": jnp.pad(p["w8"], ((0, HID - h), (0, OUT_PAD - p["w8"].shape[-1]))),
        "b8": pad_last(p["b8"], OUT_PAD),
    }


def _resident_spec(shape):
    """Weight BlockSpec: full-array block whose index never changes -> stays in VMEM."""
    nd = len(shape)
    return pl.BlockSpec(shape, lambda *_: (0,) * nd)


def fnn_forward(params, x_thickness, x_material1, x_material2, *, block_batch=512):
    kp = _prepare_kernel_params(params)
    num_materials = params["emb_table"].shape[0]

    B = x_thickness.shape[0]
    bt = min(block_batch, _round_up(B, 8))   # batch tile (multiple of 8 sublanes)
    Bp = _round_up(B, bt)

    xt = jnp.asarray(x_thickness, jnp.float32)
    m1 = jnp.asarray(x_material1, jnp.int32).reshape(B, 1)
    m2 = jnp.asarray(x_material2, jnp.int32).reshape(B, 1)
    if Bp != B:
        pad = Bp - B
        xt = jnp.pad(xt, ((0, pad), (0, 0)))
        m1 = jnp.pad(m1, ((0, pad), (0, 0)))     # id 0 is valid; rows discarded below
        m2 = jnp.pad(m2, ((0, pad), (0, 0)))

    grid = (Bp // bt,)

    out_full = pl.pallas_call(
        _make_kernel(num_materials),
        out_shape=jax.ShapeDtypeStruct((Bp, OUT_PAD), jnp.float32),
        grid_spec=pltpu.PrefetchScalarGridSpec(
            num_scalar_prefetch=0,
            grid=grid,
            in_specs=[
                pl.BlockSpec((bt, 4), lambda i: (i, 0)),
                pl.BlockSpec((bt, 1), lambda i: (i, 0)),
                pl.BlockSpec((bt, 1), lambda i: (i, 0)),
                _resident_spec(kp["w_th"].shape),
                _resident_spec(kp["b_th"].shape),
                _resident_spec(kp["w1_th"].shape),
                _resident_spec(kp["w1_m"].shape),
                _resident_spec(kp["b1"].shape),
                _resident_spec(kp["w_mid"].shape),
                _resident_spec(kp["b_mid"].shape),
                _resident_spec(kp["w8"].shape),
                _resident_spec(kp["b8"].shape),
            ],
            out_specs=pl.BlockSpec((bt, OUT_PAD), lambda i: (i, 0)),
        ),
        compiler_params=pltpu.CompilerParams(
            dimension_semantics=("parallel",),      # megacore sharding on v7x
            vmem_limit_bytes=32 * 1024 * 1024,      # headroom on 64 MiB v7x VMEM
        ),
    )(
        xt, m1, m2,
        kp["w_th"], kp["b_th"],
        kp["w1_th"], kp["w1_m"], kp["b1"],
        kp["w_mid"], kp["b_mid"],
        kp["w8"], kp["b8"],
    )
    return out_full[:B, :3]


def fnn_forward_ref(params, x_thickness, x_material1, x_material2):
    """Pure-JAX reference mirroring the PyTorch forward exactly."""
    e1 = jnp.take(params["emb_table"], x_material1, axis=0)
    e2 = jnp.take(params["emb_table"], x_material2, axis=0)
    h = jnp.maximum(x_thickness @ params["w_th"] + params["b_th"], 0.0)
    w1 = jnp.concatenate([params["w1_th"], params["w1_e1"], params["w1_e2"]], axis=0)
    x = jnp.concatenate([h, e1, e2], axis=1)
    x = jnp.maximum(x @ w1 + params["b1"], 0.0)
    for i in range(params["w_mid"].shape[0]):
        x = jnp.maximum(x @ params["w_mid"][i] + params["b_mid"][i], 0.0)
    return x @ params["w8"] + params["b8"]


if __name__ == "__main__":
    num_materials = 10
    embedding_dim = 16
    batch = 8

    key = jax.random.PRNGKey(0)
    k_params, k_th, k_m1, k_m2 = jax.random.split(key, 4)

    params = make_params(k_params, num_materials, embedding_dim)
    x_thickness = jax.random.normal(k_th, (batch, 4), jnp.float32)
    x_material1 = jax.random.randint(k_m1, (batch,), 0, num_materials, jnp.int32)
    x_material2 = jax.random.randint(k_m2, (batch,), 0, num_materials, jnp.int32)

    out = fnn_forward(params, x_thickness, x_material1, x_material2)
    out = jax.block_until_ready(out)
    ref = fnn_forward_ref(params, x_thickness, x_material1, x_material2)
    assert out.shape == (batch, 3)
    assert jnp.allclose(out, ref, atol=1e-4, rtol=1e-4), "mismatch vs reference (B=8)"

    # Exercise a multi-step grid with a non-multiple-of-tile batch (padding path).
    B2 = 200
    k2a, k2b, k2c = jax.random.split(jax.random.PRNGKey(1), 3)
    xt2 = jax.random.normal(k2a, (B2, 4), jnp.float32)
    m1_2 = jax.random.randint(k2b, (B2,), 0, num_materials, jnp.int32)
    m2_2 = jax.random.randint(k2c, (B2,), 0, num_materials, jnp.int32)
    out2 = jax.block_until_ready(
        fnn_forward(params, xt2, m1_2, m2_2, block_batch=64)
    )
    ref2 = fnn_forward_ref(params, xt2, m1_2, m2_2)
    assert out2.shape == (B2, 3)
    assert jnp.allclose(out2, ref2, atol=1e-4, rtol=1e-4), "mismatch vs reference (B=200)"

    print("KERNEL_OK")
</pallas_src>

<mosaic_0001>
module attributes {stable_mosaic.version = 11 : i64} {
  func.func @fnn_kernel(%arg0: i32, %arg1: memref<8x4xf32, #tpu.memory_space<vmem>>, %arg2: memref<8x1xi32, #tpu.memory_space<vmem>>, %arg3: memref<8x1xi32, #tpu.memory_space<vmem>>, %arg4: memref<4x128xf32, #tpu.memory_space<vmem>>, %arg5: memref<1x128xf32, #tpu.memory_space<vmem>>, %arg6: memref<128x256xf32, #tpu.memory_space<vmem>>, %arg7: memref<24x256xf32, #tpu.memory_space<vmem>>, %arg8: memref<1x256xf32, #tpu.memory_space<vmem>>, %arg9: memref<6x256x256xf32, #tpu.memory_space<vmem>>, %arg10: memref<6x1x256xf32, #tpu.memory_space<vmem>>, %arg11: memref<256x128xf32, #tpu.memory_space<vmem>>, %arg12: memref<1x128xf32, #tpu.memory_space<vmem>>, %arg13: memref<8x128xf32, #tpu.memory_space<vmem>>) attributes {dimension_semantics = [#tpu.dimension_semantics<parallel>], iteration_bounds = array<i64: 1>, scalar_prefetch = 0 : i64, scratch_operands = 0 : i64, tpu.core_type = #tpu.core_type<tc>, window_params = [{transform_indices = @transform_0, window_bounds = array<i64: 8, 4>}, {transform_indices = @transform_1, window_bounds = array<i64: 8, 1>}, {transform_indices = @transform_2, window_bounds = array<i64: 8, 1>}, {pipeline_mode = #tpu.pipeline_mode<synchronous>, transform_indices = @transform_3, window_bounds = array<i64: 4, 128>}, {pipeline_mode = #tpu.pipeline_mode<synchronous>, transform_indices = @transform_4, window_bounds = array<i64: 1, 128>}, {pipeline_mode = #tpu.pipeline_mode<synchronous>, transform_indices = @transform_5, window_bounds = array<i64: 128, 256>}, {pipeline_mode = #tpu.pipeline_mode<synchronous>, transform_indices = @transform_6, window_bounds = array<i64: 24, 256>}, {pipeline_mode = #tpu.pipeline_mode<synchronous>, transform_indices = @transform_7, window_bounds = array<i64: 1, 256>}, {pipeline_mode = #tpu.pipeline_mode<synchronous>, transform_indices = @transform_8, window_bounds = array<i64: 6, 256, 256>}, {pipeline_mode = #tpu.pipeline_mode<synchronous>, transform_indices = @transform_9, window_bounds = array<i64: 6, 1, 256>}, {pipeline_mode = #tpu.pipeline_mode<synchronous>, transform_indices = @transform_10, window_bounds = array<i64: 256, 128>}, {pipeline_mode = #tpu.pipeline_mode<synchronous>, transform_indices = @transform_11, window_bounds = array<i64: 1, 128>}, {transform_indices = @transform_12, window_bounds = array<i64: 8, 128>}]} {
    %c0 = arith.constant 0 : index
    %c0_0 = arith.constant 0 : index
    %0 = vector.load %arg1[%c0, %c0_0] : memref<8x4xf32, #tpu.memory_space<vmem>>, vector<8x4xf32>
    %c0_1 = arith.constant 0 : index
    %c0_2 = arith.constant 0 : index
    %1 = vector.load %arg4[%c0_1, %c0_2] : memref<4x128xf32, #tpu.memory_space<vmem>>, vector<4x128xf32>
    %cst = arith.constant dense<0.000000e+00> : vector<8x128xf32>
    %2 = tpu.matmul %0, %1, %cst {dimension_numbers = #tpu.dot_dimension_numbers<[1], [0], [0], [1], [0, 0, 1, 1], [], []>} : vector<8x4xf32>, vector<4x128xf32>, vector<8x128xf32> -> vector<8x128xf32>
    %c0_3 = arith.constant 0 : index
    %c0_4 = arith.constant 0 : index
    %3 = vector.load %arg5[%c0_3, %c0_4] : memref<1x128xf32, #tpu.memory_space<vmem>>, vector<1x128xf32>
    %4 = vector.broadcast %3 : vector<1x128xf32> to vector<8x128xf32>
    %5 = arith.addf %2, %4 : vector<8x128xf32>
    %cst_5 = arith.constant 0.000000e+00 : f32
    %6 = vector.broadcast %cst_5 : f32 to vector<8x128xf32>
    %7 = arith.maximumf %5, %6 : vector<8x128xf32>
    %8 = tpu.iota {dimensions = array<i32: 1>} : vector<8x24xi32>
    %c0_6 = arith.constant 0 : index
    %c0_7 = arith.constant 0 : index
    %9 = vector.load %arg2[%c0_6, %c0_7] : memref<8x1xi32, #tpu.memory_space<vmem>>, vector<8x1xi32>
    %10 = vector.broadcast %9 : vector<8x1xi32> to vector<8x24xi32>
    %11 = arith.cmpi eq, %8, %10 : vector<8x24xi32>
    %c0_8 = arith.constant 0 : index
    %c0_9 = arith.constant 0 : index
    %12 = vector.load %arg3[%c0_8, %c0_9] : memref<8x1xi32, #tpu.memory_space<vmem>>, vector<8x1xi32>
    %c10_i32 = arith.constant 10 : i32
    %13 = vector.broadcast %c10_i32 : i32 to vector<8x1xi32>
    %14 = arith.addi %12, %13 : vector<8x1xi32>
    %15 = vector.broadcast %14 : vector<8x1xi32> to vector<8x24xi32>
    %16 = arith.cmpi eq, %8, %15 : vector<8x24xi32>
    %17 = arith.ori %11, %16 : vector<8x24xi1>
    %18 = arith.extui %17 : vector<8x24xi1> to vector<8x24xi32>
    %19 = arith.sitofp %18 : vector<8x24xi32> to vector<8x24xf32>
    %c0_10 = arith.constant 0 : index
    %c0_11 = arith.constant 0 : index
    %20 = vector.load %arg6[%c0_10, %c0_11] : memref<128x256xf32, #tpu.memory_space<vmem>>, vector<128x256xf32>
    %cst_12 = arith.constant dense<0.000000e+00> : vector<8x256xf32>
    %21 = tpu.matmul %7, %20, %cst_12 {dimension_numbers = #tpu.dot_dimension_numbers<[1], [0], [0], [1], [0, 0, 1, 1], [], []>} : vector<8x128xf32>, vector<128x256xf32>, vector<8x256xf32> -> vector<8x256xf32>
    %c0_13 = arith.constant 0 : index
    %c0_14 = arith.constant 0 : index
    %22 = vector.load %arg7[%c0_13, %c0_14] : memref<24x256xf32, #tpu.memory_space<vmem>>, vector<24x256xf32>
    %cst_15 = arith.constant dense<0.000000e+00> : vector<8x256xf32>
    %23 = tpu.matmul %19, %22, %cst_15 {dimension_numbers = #tpu.dot_dimension_numbers<[1], [0], [0], [1], [0, 0, 1, 1], [], []>} : vector<8x24xf32>, vector<24x256xf32>, vector<8x256xf32> -> vector<8x256xf32>
    %24 = arith.addf %21, %23 : vector<8x256xf32>
    %c0_16 = arith.constant 0 : index
    %c0_17 = arith.constant 0 : index
    %25 = vector.load %arg8[%c0_16, %c0_17] : memref<1x256xf32, #tpu.memory_space<vmem>>, vector<1x256xf32>
    %26 = vector.broadcast %25 : vector<1x256xf32> to vector<8x256xf32>
    %27 = arith.addf %24, %26 : vector<8x256xf32>
    %cst_18 = arith.constant 0.000000e+00 : f32
    %28 = vector.broadcast %cst_18 : f32 to vector<8x256xf32>
    %29 = arith.maximumf %27, %28 : vector<8x256xf32>
    %c0_19 = arith.constant 0 : index
    %c0_20 = arith.constant 0 : index
    %c0_21 = arith.constant 0 : index
    %30 = vector.load %arg9[%c0_19, %c0_20, %c0_21] : memref<6x256x256xf32, #tpu.memory_space<vmem>>, vector<1x256x256xf32>
    %31 = vector.shape_cast %30 : vector<1x256x256xf32> to vector<256x256xf32>
    %cst_22 = arith.constant dense<0.000000e+00> : vector<8x256xf32>
    %32 = tpu.matmul %29, %31, %cst_22 {dimension_numbers = #tpu.dot_dimension_numbers<[1], [0], [0], [1], [0, 0, 1, 1], [], []>} : vector<8x256xf32>, vector<256x256xf32>, vector<8x256xf32> -> vector<8x256xf32>
    %c0_23 = arith.constant 0 : index
    %c0_24 = arith.constant 0 : index
    %c0_25 = arith.constant 0 : index
    %33 = vector.load %arg10[%c0_23, %c0_24, %c0_25] : memref<6x1x256xf32, #tpu.memory_space<vmem>>, vector<1x1x256xf32>
    %34 = vector.shape_cast %33 : vector<1x1x256xf32> to vector<1x256xf32>
    %35 = vector.broadcast %34 : vector<1x256xf32> to vector<8x256xf32>
    %36 = arith.addf %32, %35 : vector<8x256xf32>
    %cst_26 = arith.constant 0.000000e+00 : f32
    %37 = vector.broadcast %cst_26 : f32 to vector<8x256xf32>
    %38 = arith.maximumf %36, %37 : vector<8x256xf32>
    %c1 = arith.constant 1 : index
    %c0_27 = arith.constant 0 : index
    %c0_28 = arith.constant 0 : index
    %39 = vector.load %arg9[%c1, %c0_27, %c0_28] : memref<6x256x256xf32, #tpu.memory_space<vmem>>, vector<1x256x256xf32>
    %40 = vector.shape_cast %39 : vector<1x256x256xf32> to vector<256x256xf32>
    %cst_29 = arith.constant dense<0.000000e+00> : vector<8x256xf32>
    %41 = tpu.matmul %38, %40, %cst_29 {dimension_numbers = #tpu.dot_dimension_numbers<[1], [0], [0], [1], [0, 0, 1, 1], [], []>} : vector<8x256xf32>, vector<256x256xf32>, vector<8x256xf32> -> vector<8x256xf32>
    %c1_30 = arith.constant 1 : index
    %c0_31 = arith.constant 0 : index
    %c0_32 = arith.constant 0 : index
    %42 = vector.load %arg10[%c1_30, %c0_31, %c0_32] : memref<6x1x256xf32, #tpu.memory_space<vmem>>, vector<1x1x256xf32>
    %43 = vector.shape_cast %42 : vector<1x1x256xf32> to vector<1x256xf32>
    %44 = vector.broadcast %43 : vector<1x256xf32> to vector<8x256xf32>
    %45 = arith.addf %41, %44 : vector<8x256xf32>
    %cst_33 = arith.constant 0.000000e+00 : f32
    %46 = vector.broadcast %cst_33 : f32 to vector<8x256xf32>
    %47 = arith.maximumf %45, %46 : vector<8x256xf32>
    %c2 = arith.constant 2 : index
    %c0_34 = arith.constant 0 : index
    %c0_35 = arith.constant 0 : index
    %48 = vector.load %arg9[%c2, %c0_34, %c0_35] : memref<6x256x256xf32, #tpu.memory_space<vmem>>, vector<1x256x256xf32>
    %49 = vector.shape_cast %48 : vector<1x256x256xf32> to vector<256x256xf32>
    %cst_36 = arith.constant dense<0.000000e+00> : vector<8x256xf32>
    %50 = tpu.matmul %47, %49, %cst_36 {dimension_numbers = #tpu.dot_dimension_numbers<[1], [0], [0], [1], [0, 0, 1, 1], [], []>} : vector<8x256xf32>, vector<256x256xf32>, vector<8x256xf32> -> vector<8x256xf32>
    %c2_37 = arith.constant 2 : index
    %c0_38 = arith.constant 0 : index
    %c0_39 = arith.constant 0 : index
    %51 = vector.load %arg10[%c2_37, %c0_38, %c0_39] : memref<6x1x256xf32, #tpu.memory_space<vmem>>, vector<1x1x256xf32>
    %52 = vector.shape_cast %51 : vector<1x1x256xf32> to vector<1x256xf32>
    %53 = vector.broadcast %52 : vector<1x256xf32> to vector<8x256xf32>
    %54 = arith.addf %50, %53 : vector<8x256xf32>
    %cst_40 = arith.constant 0.000000e+00 : f32
    %55 = vector.broadcast %cst_40 : f32 to vector<8x256xf32>
    %56 = arith.maximumf %54, %55 : vector<8x256xf32>
    %c3 = arith.constant 3 : index
    %c0_41 = arith.constant 0 : index
    %c0_42 = arith.constant 0 : index
    %57 = vector.load %arg9[%c3, %c0_41, %c0_42] : memref<6x256x256xf32, #tpu.memory_space<vmem>>, vector<1x256x256xf32>
    %58 = vector.shape_cast %57 : vector<1x256x256xf32> to vector<256x256xf32>
    %cst_43 = arith.constant dense<0.000000e+00> : vector<8x256xf32>
    %59 = tpu.matmul %56, %58, %cst_43 {dimension_numbers = #tpu.dot_dimension_numbers<[1], [0], [0], [1], [0, 0, 1, 1], [], []>} : vector<8x256xf32>, vector<256x256xf32>, vector<8x256xf32> -> vector<8x256xf32>
    %c3_44 = arith.constant 3 : index
    %c0_45 = arith.constant 0 : index
    %c0_46 = arith.constant 0 : index
    %60 = vector.load %arg10[%c3_44, %c0_45, %c0_46] : memref<6x1x256xf32, #tpu.memory_space<vmem>>, vector<1x1x256xf32>
    %61 = vector.shape_cast %60 : vector<1x1x256xf32> to vector<1x256xf32>
    %62 = vector.broadcast %61 : vector<1x256xf32> to vector<8x256xf32>
    %63 = arith.addf %59, %62 : vector<8x256xf32>
    %cst_47 = arith.constant 0.000000e+00 : f32
    %64 = vector.broadcast %cst_47 : f32 to vector<8x256xf32>
    %65 = arith.maximumf %63, %64 : vector<8x256xf32>
    %c4 = arith.constant 4 : index
    %c0_48 = arith.constant 0 : index
    %c0_49 = arith.constant 0 : index
    %66 = vector.load %arg9[%c4, %c0_48, %c0_49] : memref<6x256x256xf32, #tpu.memory_space<vmem>>, vector<1x256x256xf32>
    %67 = vector.shape_cast %66 : vector<1x256x256xf32> to vector<256x256xf32>
    %cst_50 = arith.constant dense<0.000000e+00> : vector<8x256xf32>
    %68 = tpu.matmul %65, %67, %cst_50 {dimension_numbers = #tpu.dot_dimension_numbers<[1], [0], [0], [1], [0, 0, 1, 1], [], []>} : vector<8x256xf32>, vector<256x256xf32>, vector<8x256xf32> -> vector<8x256xf32>
    %c4_51 = arith.constant 4 : index
    %c0_52 = arith.constant 0 : index
    %c0_53 = arith.constant 0 : index
    %69 = vector.load %arg10[%c4_51, %c0_52, %c0_53] : memref<6x1x256xf32, #tpu.memory_space<vmem>>, vector<1x1x256xf32>
    %70 = vector.shape_cast %69 : vector<1x1x256xf32> to vector<1x256xf32>
    %71 = vector.broadcast %70 : vector<1x256xf32> to vector<8x256xf32>
    %72 = arith.addf %68, %71 : vector<8x256xf32>
    %cst_54 = arith.constant 0.000000e+00 : f32
    %73 = vector.broadcast %cst_54 : f32 to vector<8x256xf32>
    %74 = arith.maximumf %72, %73 : vector<8x256xf32>
    %c5 = arith.constant 5 : index
    %c0_55 = arith.constant 0 : index
    %c0_56 = arith.constant 0 : index
    %75 = vector.load %arg9[%c5, %c0_55, %c0_56] : memref<6x256x256xf32, #tpu.memory_space<vmem>>, vector<1x256x256xf32>
    %76 = vector.shape_cast %75 : vector<1x256x256xf32> to vector<256x256xf32>
    %cst_57 = arith.constant dense<0.000000e+00> : vector<8x256xf32>
    %77 = tpu.matmul %74, %76, %cst_57 {dimension_numbers = #tpu.dot_dimension_numbers<[1], [0], [0], [1], [0, 0, 1, 1], [], []>} : vector<8x256xf32>, vector<256x256xf32>, vector<8x256xf32> -> vector<8x256xf32>
    %c5_58 = arith.constant 5 : index
    %c0_59 = arith.constant 0 : index
    %c0_60 = arith.constant 0 : index
    %78 = vector.load %arg10[%c5_58, %c0_59, %c0_60] : memref<6x1x256xf32, #tpu.memory_space<vmem>>, vector<1x1x256xf32>
    %79 = vector.shape_cast %78 : vector<1x1x256xf32> to vector<1x256xf32>
    %80 = vector.broadcast %79 : vector<1x256xf32> to vector<8x256xf32>
    %81 = arith.addf %77, %80 : vector<8x256xf32>
    %cst_61 = arith.constant 0.000000e+00 : f32
    %82 = vector.broadcast %cst_61 : f32 to vector<8x256xf32>
    %83 = arith.maximumf %81, %82 : vector<8x256xf32>
    %c0_62 = arith.constant 0 : index
    %c0_63 = arith.constant 0 : index
    %84 = vector.load %arg11[%c0_62, %c0_63] : memref<256x128xf32, #tpu.memory_space<vmem>>, vector<256x128xf32>
    %cst_64 = arith.constant dense<0.000000e+00> : vector<8x128xf32>
    %85 = tpu.matmul %83, %84, %cst_64 {dimension_numbers = #tpu.dot_dimension_numbers<[1], [0], [0], [1], [0, 0, 1, 1], [], []>} : vector<8x256xf32>, vector<256x128xf32>, vector<8x128xf32> -> vector<8x128xf32>
    %c0_65 = arith.constant 0 : index
    %c0_66 = arith.constant 0 : index
    %86 = vector.load %arg12[%c0_65, %c0_66] : memref<1x128xf32, #tpu.memory_space<vmem>>, vector<1x128xf32>
    %87 = vector.broadcast %86 : vector<1x128xf32> to vector<8x128xf32>
    %88 = arith.addf %85, %87 : vector<8x128xf32>
    %c0_67 = arith.constant 0 : index
    %c0_68 = arith.constant 0 : index
    %89 = vector.load %arg13[%c0_67, %c0_68] : memref<8x128xf32, #tpu.memory_space<vmem>>, vector<8x128xf32>
    tpu.vector_store %arg13[%c0_67, %c0_68], %88 {strides = array<i32>} : memref<8x128xf32, #tpu.memory_space<vmem>>, vector<8x128xf32>,
    return
  }
  func.func @transform_0(%arg0: i32) -> (i32, i32) {
    %c0_i32 = arith.constant 0 : i32
    %c0_i32_0 = arith.constant 0 : i32
    return %arg0, %c0_i32 : i32, i32
  }
  func.func @transform_1(%arg0: i32) -> (i32, i32) {
    %c0_i32 = arith.constant 0 : i32
    %c0_i32_0 = arith.constant 0 : i32
    return %arg0, %c0_i32 : i32, i32
  }
  func.func @transform_2(%arg0: i32) -> (i32, i32) {
    %c0_i32 = arith.constant 0 : i32
    %c0_i32_0 = arith.constant 0 : i32
    return %arg0, %c0_i32 : i32, i32
  }
  func.func @transform_3(%arg0: i32) -> (i32, i32) {
    %c0_i32 = arith.constant 0 : i32
    %c0_i32_0 = arith.constant 0 : i32
    %c0_i32_1 = arith.constant 0 : i32
    return %c0_i32, %c0_i32_0 : i32, i32
  }
  func.func @transform_4(%arg0: i32) -> (i32, i32) {
    %c0_i32 = arith.constant 0 : i32
    %c0_i32_0 = arith.constant 0 : i32
    %c0_i32_1 = arith.constant 0 : i32
    return %c0_i32, %c0_i32_0 : i32, i32
  }
  func.func @transform_5(%arg0: i32) -> (i32, i32) {
    %c0_i32 = arith.constant 0 : i32
    %c0_i32_0 = arith.constant 0 : i32
    %c0_i32_1 = arith.constant 0 : i32
    return %c0_i32, %c0_i32_0 : i32, i32
  }
  func.func @transform_6(%arg0: i32) -> (i32, i32) {
    %c0_i32 = arith.constant 0 : i32
    %c0_i32_0 = arith.constant 0 : i32
    %c0_i32_1 = arith.constant 0 : i32
    return %c0_i32, %c0_i32_0 : i32, i32
  }
  func.func @transform_7(%arg0: i32) -> (i32, i32) {
    %c0_i32 = arith.constant 0 : i32
    %c0_i32_0 = arith.constant 0 : i32
    %c0_i32_1 = arith.constant 0 : i32
    return %c0_i32, %c0_i32_0 : i32, i32
  }
  func.func @transform_8(%arg0: i32) -> (i32, i32, i32) {
    %c0_i32 = arith.constant 0 : i32
    %c0_i32_0 = arith.constant 0 : i32
    %c0_i32_1 = arith.constant 0 : i32
    %c0_i32_2 = arith.constant 0 : i32
    return %c0_i32, %c0_i32_0, %c0_i32_1 : i32, i32, i32
  }
  func.func @transform_9(%arg0: i32) -> (i32, i32, i32) {
    %c0_i32 = arith.constant 0 : i32
    %c0_i32_0 = arith.constant 0 : i32
    %c0_i32_1 = arith.constant 0 : i32
    %c0_i32_2 = arith.constant 0 : i32
    return %c0_i32, %c0_i32_0, %c0_i32_1 : i32, i32, i32
  }
  func.func @transform_10(%arg0: i32) -> (i32, i32) {
    %c0_i32 = arith.constant 0 : i32
    %c0_i32_0 = arith.constant 0 : i32
    %c0_i32_1 = arith.constant 0 : i32
    return %c0_i32, %c0_i32_0 : i32, i32
  }
  func.func @transform_11(%arg0: i32) -> (i32, i32) {
    %c0_i32 = arith.constant 0 : i32
    %c0_i32_0 = arith.constant 0 : i32
    %c0_i32_1 = arith.constant 0 : i32
    return %c0_i32, %c0_i32_0 : i32, i32
  }
  func.func @transform_12(%arg0: i32) -> (i32, i32) {
    %c0_i32 = arith.constant 0 : i32
    %c0_i32_0 = arith.constant 0 : i32
    return %arg0, %c0_i32 : i32, i32
  }
}

</mosaic_0001>

<llo_original>
// kernel: tpu_custom_call.1
$region0: #{tpu_custom_call.1}
  #allocation0 [shape = 'u32[]', space=smem, size = 0x4, offset = 0x4, fixed_abs, tag = 'smem constant byte address 0x4 - core index']
  #allocation1 [shape = 'u32[144,128]{1,0:T(1,128)}', space=vmem, size = 0x12000, scoped, tag = 'internal scratch']
  %s0 = inlined_call_operand.vmem [shape: f32[8,4], index: 0, kind: input, shape index: {}]
  %s1 = inlined_call_operand.vmem [shape: s32[8,1], index: 1, kind: input, shape index: {}]
  %s2 = inlined_call_operand.vmem [shape: s32[8,1], index: 2, kind: input, shape index: {}]
  %s3 = inlined_call_operand.hbm [shape: f32[4,128], index: 3, kind: input, shape index: {}]
  %s4 = inlined_call_operand.hbm [shape: f32[1,128], index: 4, kind: input, shape index: {}]
  %s5 = inlined_call_operand.hbm [shape: f32[128,256], index: 5, kind: input, shape index: {}]
  %s6 = inlined_call_operand.hbm [shape: f32[24,256], index: 6, kind: input, shape index: {}]
  %s7 = inlined_call_operand.hbm [shape: f32[1,256], index: 7, kind: input, shape index: {}]
  %s8 = inlined_call_operand.hbm [shape: f32[6,256,256], index: 8, kind: input, shape index: {}]
  %s9 = inlined_call_operand.hbm [shape: f32[6,1,256], index: 9, kind: input, shape index: {}]
  %s10 = inlined_call_operand.hbm [shape: f32[256,128], index: 10, kind: input, shape index: {}]
  %s11 = inlined_call_operand.hbm [shape: f32[1,128], index: 11, kind: input, shape index: {}]
  %s12 = inlined_call_operand.hbm [shape: f32[8,128], index: 12, kind: output, shape index: {}]
  %s13 = sld [smem:[#allocation0]]
  $region94: #{tpu_custom_call.1} parent=0
    _
  %s15 = ssub.s32 1, %s13
  %s16 = scalar_select 0, %s15, %s13
  $region1: #{tpu_custom_call.1} parent=0
    #allocation2 [shape = 'u8[2048]{0}', space=vmem, size = 0x800, scoped, tag = 'input window, operand 3, single buffered']
    #allocation3 [shape = 's32[1]{0}', space=sflag, size = 0x4, scoped, tag = 'scoped memory for tpu_custom_call.1']
    #allocation4 [shape = 's32[1]{0}', space=sflag, size = 0x4, scoped, tag = 'scoped memory for tpu_custom_call.1']
    #allocation5 [shape = 'u8[512]{0}', space=vmem, size = 0x400, scoped, tag = 'input window, operand 4, single buffered']
    #allocation6 [shape = 's32[1]{0}', space=sflag, size = 0x4, scoped, tag = 'scoped memory for tpu_custom_call.1']
    #allocation7 [shape = 'u8[131072]{0}', space=vmem, size = 0x20000, scoped, tag = 'input window, operand 5, single buffered']
    #allocation8 [shape = 'u8[24576]{0}', space=vmem, size = 0x6000, scoped, tag = 'input window, operand 6, single buffered']
    #allocation9 [shape = 's32[1]{0}', space=sflag, size = 0x4, scoped, tag = 'scoped memory for tpu_custom_call.1']
    #allocation10 [shape = 'u8[1024]{0}', space=vmem, size = 0x400, scoped, tag = 'input window, operand 7, single buffered']
    #allocation11 [shape = 'u8[1572864]{0}', space=vmem, size = 0x180000, scoped, tag = 'input window, operand 8, single buffered']
    #allocation12 [shape = 's32[1]{0}', space=sflag, size = 0x4, scoped, tag = 'scoped memory for tpu_custom_call.1']
    #allocation13 [shape = 'u8[6144]{0}', space=vmem, size = 0x1800, scoped, tag = 'input window, operand 9, single buffered']
    #allocation14 [shape = 'u8[131072]{0}', space=vmem, size = 0x20000, scoped, tag = 'input window, operand 10, single buffered']
    #allocation15 [shape = 's32[1]{0}', space=sflag, size = 0x4, scoped, tag = 'scoped memory for tpu_custom_call.1']
    #allocation16 [shape = 'u8[512]{0}', space=vmem, size = 0x400, scoped, tag = 'input window, operand 11, single buffered']
    #allocation17 [shape = 'u8[4096]{0}', space=vmem, size = 0x1000, scoped, tag = 'output window, operand 0, single buffered']
    %17 = vsyncpa [#allocation3], 0
    %18 = vsyncpa [#allocation6], 0
    %19 = vsyncpa [#allocation9], 0
    %20 = vsyncpa [#allocation12], 0
    %21 = vsyncpa [#allocation15], 0
    %22 = vsyncpa [#allocation4], 0
    // Predicated region
    $region2: #{tpu_custom_call.1} parent=1 // pred_check
      _
    $region3: #{tpu_custom_call.1} parent=1 // pred_check_branch
      %24 = sbr.rel (0) target = $region5
    $region4: #{tpu_custom_call.1} parent=1 // pred_region
      _
    $region5: #{tpu_custom_call.1} parent=1 // pred_fallthru
      _
    // Predicated region
    $region6: #{tpu_custom_call.1} parent=1 // pred_check
      _
    $region7: #{tpu_custom_call.1} parent=1 // pred_check_branch
      %26 = sbr.rel (0) target = $region9
    $region8: #{tpu_custom_call.1} parent=1 // pred_region
      _
    $region9: #{tpu_custom_call.1} parent=1 // pred_fallthru
      _
    // Predicated region
    $region10: #{tpu_custom_call.1} parent=1 // pred_check
      _
    $region11: #{tpu_custom_call.1} parent=1 // pred_check_branch
      %28 = sbr.rel (0) target = $region13
    $region12: #{tpu_custom_call.1} parent=1 // pred_region
      _
    $region13: #{tpu_custom_call.1} parent=1 // pred_fallthru
      _
    // Predicated region
    $region14: #{tpu_custom_call.1} parent=1 // pred_check
      _
    $region15: #{tpu_custom_call.1} parent=1 // pred_check_branch
      %30 = sbr.rel (0) target = $region17
    $region16: #{tpu_custom_call.1} parent=1 // pred_region
      %s32 = ssub.s32 64, 64
      %33 = vsyncadd [#allocation3], %s32
      %s35 = sshll.u32 [#allocation2], 4
      %s36 = int_to_ptr.vmem [resolvable:$true] %s35
      %38 = dma.hbm_to_vmem [thread:$0]  %s3, 64, %s36, [#allocation3]
    $region17: #{tpu_custom_call.1} parent=1 // pred_fallthru
      _
    // Predicated region
    $region18: #{tpu_custom_call.1} parent=1 // pred_check
      _
    $region19: #{tpu_custom_call.1} parent=1 // pred_check_branch
      %40 = sbr.rel (0) target = $region21
    $region20: #{tpu_custom_call.1} parent=1 // pred_region
      %s42 = ssub.s32 16, 16
      %43 = vsyncadd [#allocation6], %s42
      %s45 = sshll.u32 [#allocation5], 4
      %s46 = int_to_ptr.vmem [resolvable:$true] %s45
      %48 = dma.hbm_to_vmem [thread:$0]  %s4, 16, %s46, [#allocation6]
    $region21: #{tpu_custom_call.1} parent=1 // pred_fallthru
      _
    // Predicated region
    $region22: #{tpu_custom_call.1} parent=1 // pred_check
      _
    $region23: #{tpu_custom_call.1} parent=1 // pred_check_branch
      %50 = sbr.rel (0) target = $region25
    $region24: #{tpu_custom_call.1} parent=1 // pred_region
      %s52 = ssub.s32 4096, 4096
      %53 = vsyncadd [#allocation6], %s52
      %s54 = sshll.u32 [#allocation7], 4
      %s55 = int_to_ptr.vmem [resolvable:$true] %s54
      %60 = dma.hbm_to_vmem [thread:$0]  %s5, 4096, %s55, [#allocation6], 256, 256, 16
    $region25: #{tpu_custom_call.1} parent=1 // pred_fallthru
      _
    // Predicated region
    $region26: #{tpu_custom_call.1} parent=1 // pred_check
      _
    $region27: #{tpu_custom_call.1} parent=1 // pred_check_branch
      %62 = sbr.rel (0) target = $region29
    $region28: #{tpu_custom_call.1} parent=1 // pred_region
      %s64 = ssub.s32 768, 768
      %65 = vsyncadd [#allocation9], %s64
      %s66 = sshll.u32 [#allocation8], 4
      %s67 = int_to_ptr.vmem [resolvable:$true] %s66
      %72 = dma.hbm_to_vmem [thread:$0]  %s6, 768, %s67, [#allocation9], 256, 256, 16
    $region29: #{tpu_custom_call.1} parent=1 // pred_fallthru
      _
    // Predicated region
    $region30: #{tpu_custom_call.1} parent=1 // pred_check
      _
    $region31: #{tpu_custom_call.1} parent=1 // pred_check_branch
      %74 = sbr.rel (0) target = $region33
    $region32: #{tpu_custom_call.1} parent=1 // pred_region
      %s76 = ssub.s32 32, 32
      %77 = vsyncadd [#allocation9], %s76
      %s79 = sshll.u32 [#allocation10], 4
      %s80 = int_to_ptr.vmem [resolvable:$true] %s79
      %82 = dma.hbm_to_vmem [thread:$0]  %s7, 32, %s80, [#allocation9]
    $region33: #{tpu_custom_call.1} parent=1 // pred_fallthru
      _
    // Predicated region
    $region34: #{tpu_custom_call.1} parent=1 // pred_check
      _
    $region35: #{tpu_custom_call.1} parent=1 // pred_check_branch
      %84 = sbr.rel (0) target = $region37
    $region36: #{tpu_custom_call.1} parent=1 // pred_region
      %s86 = ssub.s32 49152, 49152
      %87 = vsyncadd [#allocation12], %s86
      %s88 = sshll.u32 [#allocation11], 4
      %s89 = int_to_ptr.vmem [resolvable:$true] %s88
      %94 = dma.hbm_to_vmem [thread:$0]  %s8, 49152, %s89, [#allocation12], 256, 256, 16
    $region37: #{tpu_custom_call.1} parent=1 // pred_fallthru
      _
    // Predicated region
    $region38: #{tpu_custom_call.1} parent=1 // pred_check
      _
    $region39: #{tpu_custom_call.1} parent=1 // pred_check_branch
      %96 = sbr.rel (0) target = $region41
    $region40: #{tpu_custom_call.1} parent=1 // pred_region
      %s98 = ssub.s32 192, 192
      %99 = vsyncadd [#allocation12], %s98
      %s100 = sshll.u32 [#allocation13], 4
      %s101 = int_to_ptr.vmem [resolvable:$true] %s100
      %106 = dma.hbm_to_vmem [thread:$0]  %s9, 192, %s101, [#allocation12], 32, 32, 2
    $region41: #{tpu_custom_call.1} parent=1 // pred_fallthru
      _
    // Predicated region
    $region42: #{tpu_custom_call.1} parent=1 // pred_check
      _
    $region43: #{tpu_custom_call.1} parent=1 // pred_check_branch
      %108 = sbr.rel (0) target = $region45
    $region44: #{tpu_custom_call.1} parent=1 // pred_region
      %s110 = ssub.s32 4096, 4096
      %111 = vsyncadd [#allocation15], %s110
      %s112 = sshll.u32 [#allocation14], 4
      %s113 = int_to_ptr.vmem [resolvable:$true] %s112
      %118 = dma.hbm_to_vmem [thread:$0]  %s10, 4096, %s113, [#allocation15], 128, 128, 8
    $region45: #{tpu_custom_call.1} parent=1 // pred_fallthru
      _
    // Predicated region
    $region46: #{tpu_custom_call.1} parent=1 // pred_check
      _
    $region47: #{tpu_custom_call.1} parent=1 // pred_check_branch
      %120 = sbr.rel (0) target = $region49
    $region48: #{tpu_custom_call.1} parent=1 // pred_region
      %s122 = ssub.s32 16, 16
      %123 = vsyncadd [#allocation15], %s122
      %s125 = sshll.u32 [#allocation16], 4
      %s126 = int_to_ptr.vmem [resolvable:$true] %s125
      %128 = dma.hbm_to_vmem [thread:$0]  %s11, 16, %s126, [#allocation15]
    $region49: #{tpu_custom_call.1} parent=1 // pred_fallthru
      _
    // Predicated region
    $region50: #{tpu_custom_call.1} parent=1 // pred_check
      _
    $region51: #{tpu_custom_call.1} parent=1 // pred_check_branch
      %130 = sbr.rel (0) target = $region53
    $region52: #{tpu_custom_call.1} parent=1 // pred_region
      %131 = dma.done [#allocation3], 64
    $region53: #{tpu_custom_call.1} parent=1 // pred_fallthru
      _
    // Predicated region
    $region54: #{tpu_custom_call.1} parent=1 // pred_check
      _
    $region55: #{tpu_custom_call.1} parent=1 // pred_check_branch
      %133 = sbr.rel (0) target = $region57
    $region56: #{tpu_custom_call.1} parent=1 // pred_region
      %134 = dma.done [#allocation6], 16
    $region57: #{tpu_custom_call.1} parent=1 // pred_fallthru
      _
    // Predicated region
    $region58: #{tpu_custom_call.1} parent=1 // pred_check
      _
    $region59: #{tpu_custom_call.1} parent=1 // pred_check_branch
      %136 = sbr.rel (0) target = $region61
    $region60: #{tpu_custom_call.1} parent=1 // pred_region
      %137 = dma.done [#allocation6], 4096
    $region61: #{tpu_custom_call.1} parent=1 // pred_fallthru
      _
    // Predicated region
    $region62: #{tpu_custom_call.1} parent=1 // pred_check
      _
    $region63: #{tpu_custom_call.1} parent=1 // pred_check_branch
      %139 = sbr.rel (0) target = $region65
    $region64: #{tpu_custom_call.1} parent=1 // pred_region
      %140 = dma.done [#allocation9], 768
    $region65: #{tpu_custom_call.1} parent=1 // pred_fallthru
      _
    // Predicated region
    $region66: #{tpu_custom_call.1} parent=1 // pred_check
      _
    $region67: #{tpu_custom_call.1} parent=1 // pred_check_branch
      %142 = sbr.rel (0) target = $region69
    $region68: #{tpu_custom_call.1} parent=1 // pred_region
      %143 = dma.done [#allocation9], 32
    $region69: #{tpu_custom_call.1} parent=1 // pred_fallthru
      _
    // Predicated region
    $region70: #{tpu_custom_call.1} parent=1 // pred_check
      _
    $region71: #{tpu_custom_call.1} parent=1 // pred_check_branch
      %145 = sbr.rel (0) target = $region73
    $region72: #{tpu_custom_call.1} parent=1 // pred_region
      %146 = dma.done [#allocation12], 49152
    $region73: #{tpu_custom_call.1} parent=1 // pred_fallthru
      _
    // Predicated region
    $region74: #{tpu_custom_call.1} parent=1 // pred_check
      _
    $region75: #{tpu_custom_call.1} parent=1 // pred_check_branch
      %148 = sbr.rel (0) target = $region77
    $region76: #{tpu_custom_call.1} parent=1 // pred_region
      %149 = dma.done [#allocation12], 192
    $region77: #{tpu_custom_call.1} parent=1 // pred_fallthru
      _
    // Predicated region
    $region78: #{tpu_custom_call.1} parent=1 // pred_check
      _
    $region79: #{tpu_custom_call.1} parent=1 // pred_check_branch
      %151 = sbr.rel (0) target = $region81
    $region80: #{tpu_custom_call.1} parent=1 // pred_region
      %152 = dma.done [#allocation15], 4096
    $region81: #{tpu_custom_call.1} parent=1 // pred_fallthru
      _
    // Predicated region
    $region82: #{tpu_custom_call.1} parent=1 // pred_check
      _
    $region83: #{tpu_custom_call.1} parent=1 // pred_check_branch
      %154 = sbr.rel (0) target = $region85
    $region84: #{tpu_custom_call.1} parent=1 // pred_region
      %155 = dma.done [#allocation15], 16
    $region85: #{tpu_custom_call.1} parent=1 // pred_fallthru
      _
    %v156 = vld [vmem:[%s0] sm:$0xff]
    %v157 = vld [vmem:[#allocation2] sm:$0xf]
    %v158 = vld [vmem:[#allocation5] sm:$0x1]
    %v160 = vlaneseq
    %v161 = vshrl.u32 %v160, 7
    %v162 = vsub.s32 0, %v161
    %v163 = vrot.slane %v158, %v162
    %vm165 = vcmask 31744
    %v167 = vsel %vm165, %v156, 0
    %vm169 = vcmask 1043456
    %v171 = vsel %vm169, %v157, 0
    %173 = vmatprep.subr.mxu0 0.0
    %174 = vmatpush1.msra.mxu0 %v171
    %175 = vmatprep.subr.mxu0 0.0
    %176 = vmatpush1.msra.mxu0 0.0
    %177 = vmatprep.subr.mxu0 0.0
    %178 = vmatpush1.msra.mxu0 0.0
    %179 = vmatprep.subr.mxu0 0.0
    %180 = vmatpush1.msra.mxu0 0.0
    %181 = vmatprep.subr.mxu0 0.0
    %182 = vmatpush1.msra.mxu0 0.0
    %183 = vmatprep.subr.mxu0 0.0
    %184 = vmatpush1.msra.mxu0 0.0
    %185 = vmatprep.subr.mxu0 0.0
    %186 = vmatpush1.msra.mxu0 0.0
    %187 = vmatprep.subr.mxu0 0.0
    %188 = vmatpush1.msra.mxu0 0.0
    %189 = vmatprep.subr.mxu0 0.0
    %190 = vmatpush1.msra.mxu0 0.0
    %191 = vmatprep.subr.mxu0 0.0
    %192 = vmatpush1.msra.mxu0 0.0
    %193 = vmatprep.subr.mxu0 0.0
    %194 = vmatpush1.msra.mxu0 0.0
    %195 = vmatprep.subr.mxu0 0.0
    %196 = vmatpush1.msra.mxu0 0.0
    %197 = vmatprep.subr.mxu0 0.0
    %198 = vmatpush1.msra.mxu0 0.0
    %199 = vmatprep.subr.mxu0 0.0
    %200 = vmatpush1.msra.mxu0 0.0
    %201 = vmatprep.subr.mxu0 0.0
    %202 = vmatpush1.msra.mxu0 0.0
    %203 = vmatprep.subr.mxu0 0.0
    %204 = vmatpush1.msra.mxu0 0.0
    %205 = vmatprep.subr.mxu0 0.0
    %206 = vmatpush1.msra.mxu0 0.0
    %207 = vmatprep.subr.mxu0 0.0
    %208 = vmatpush1.msra.mxu0 0.0
    %209 = vmatprep.subr.mxu0 0.0
    %210 = vmatpush1.msra.mxu0 0.0
    %211 = vmatprep.subr.mxu0 0.0
    %212 = vmatpush1.msra.mxu0 0.0
    %213 = vmatprep.subr.mxu0 0.0
    %214 = vmatpush1.msra.mxu0 0.0
    %215 = vmatprep.subr.mxu0 0.0
    %216 = vmatpush1.msra.mxu0 0.0
    %217 = vmatprep.subr.mxu0 0.0
    %218 = vmatpush1.msra.mxu0 0.0
    %219 = vmatprep.subr.mxu0 0.0
    %220 = vmatpush1.msra.mxu0 0.0
    %221 = vmatprep.subr.mxu0 0.0
    %222 = vmatpush1.msra.mxu0 0.0
    %223 = vmatprep.subr.mxu0 0.0
    %224 = vmatpush1.msra.mxu0 0.0
    %225 = vmatprep.subr.mxu0 0.0
    %226 = vmatpush1.msra.mxu0 0.0
    %227 = vmatprep.subr.mxu0 0.0
    %228 = vmatpush1.msra.mxu0 0.0
    %229 = vmatprep.subr.mxu0 0.0
    %230 = vmatpush1.msra.mxu0 0.0
    %231 = vmatprep.subr.mxu0 0.0
    %232 = vmatpush1.msra.mxu0 0.0
    %233 = vmatprep.subr.mxu0 0.0
    %234 = vmatpush1.msra.mxu0 0.0
    %235 = vmatprep.subr.mxu0 0.0
    %236 = vmatpush1.msra.mxu0 0.0
    %237 = vmatprep.mubr.f32.mxu0 0.0
    %238 = vmatmul.mubr.f32.gmra.mrb[0].mxu0 %v167
    %v239 = vpop.f32.mrb[0].mxu0
    %v240 = vadd.f32 %v163, %v239
    %v241 = vpop.f32.mrb[0].mxu0
    %242 = vdwg.mxu0
    %v243 = vmax.f32 %v240, 0.0
    %v244 = vlaneseq
    %v245 = vand.u32 %v244, 127
    %v246 = vld [vmem:[%s1] sm:$0xff]
    %247 = vset.pattern.permute.xlu0 0
    %248 = vperm.xlu0 %247, %v246
    %v249 = vpop.permute.xlu0 %248
    %vm250 = vcmp.eq.s32.totalorder %v245, %v249
    %v251 = vld [vmem:[%s2] sm:$0xff]
    %v252 = vadd.s32 %v251, 10
    %253 = vset.pattern.permute.xlu0 0
    %254 = vperm.xlu0 %253, %v252
    %v255 = vpop.permute.xlu0 %254
    %vm256 = vcmp.eq.s32.totalorder %v245, %v255
    %vm257 = vmor %vm250, %vm256
    %v258 = vsel %vm257, 1, 0
    %v259 = vcvt.s32.f32 %v258
    %v260 = vld [vmem:[#allocation7] sm:$0xff]
    %v261 = vld [vmem:[#allocation7 + $0x8] sm:$0xff]
    %v262 = vld [vmem:[#allocation7 + $0x10] sm:$0xff]
    %v263 = vld [vmem:[#allocation7 + $0x18] sm:$0xff]
    %v264 = vld [vmem:[#allocation7 + $0x20] sm:$0xff]
    %v265 = vld [vmem:[#allocation7 + $0x28] sm:$0xff]
    %v266 = vld [vmem:[#allocation7 + $0x30] sm:$0xff]
    %v267 = vld [vmem:[#allocation7 + $0x38] sm:$0xff]
    %v268 = vld [vmem:[#allocation7 + $0x40] sm:$0xff]
    %v269 = vld [vmem:[#allocation7 + $0x48] sm:$0xff]
    %v270 = vld [vmem:[#allocation7 + $0x50] sm:$0xff]
    %v271 = vld [vmem:[#allocation7 + $0x58] sm:$0xff]
    %v272 = vld [vmem:[#allocation7 + $0x60] sm:$0xff]
    %v273 = vld [vmem:[#allocation7 + $0x68] sm:$0xff]
    %v274 = vld [vmem:[#allocation7 + $0x70] sm:$0xff]
    %v275 = vld [vmem:[#allocation7 + $0x78] sm:$0xff]
    %v276 = vld [vmem:[#allocation7 + $0x80] sm:$0xff]
    %v277 = vld [vmem:[#allocation7 + $0x88] sm:$0xff]
    %v278 = vld [vmem:[#allocation7 + $0x90] sm:$0xff]
    %v279 = vld [vmem:[#allocation7 + $0x98] sm:$0xff]
    %v280 = vld [vmem:[#allocation7 + $0xa0] sm:$0xff]
    %v281 = vld [vmem:[#allocation7 + $0xa8] sm:$0xff]
    %v282 = vld [vmem:[#allocation7 + $0xb0] sm:$0xff]
    %v283 = vld [vmem:[#allocation7 + $0xb8] sm:$0xff]
    %v284 = vld [vmem:[#allocation7 + $0xc0] sm:$0xff]
    %v285 = vld [vmem:[#allocation7 + $0xc8] sm:$0xff]
    %v286 = vld [vmem:[#allocation7 + $0xd0] sm:$0xff]
    %v287 = vld [vmem:[#allocation7 + $0xd8] sm:$0xff]
    %v288 = vld [vmem:[#allocation7 + $0xe0] sm:$0xff]
    %v289 = vld [vmem:[#allocation7 + $0xe8] sm:$0xff]
    %v290 = vld [vmem:[#allocation7 + $0xf0] sm:$0xff]
    %v291 = vld [vmem:[#allocation7 + $0xf8] sm:$0xff]
    %v292 = vld [vmem:[#allocation8] sm:$0xff]
    %v293 = vld [vmem:[#allocation8 + $0x8] sm:$0xff]
    %v294 = vld [vmem:[#allocation8 + $0x10] sm:$0xff]
    %v295 = vld [vmem:[#allocation8 + $0x18] sm:$0xff]
    %v296 = vld [vmem:[#allocation8 + $0x20] sm:$0xff]
    %v297 = vld [vmem:[#allocation8 + $0x28] sm:$0xff]
    %vm298 = vcmask 195584
    %v300 = vsel %vm298, %v259, 0
    %302 = vmatprep.subr.mxu0 %v293
    %303 = vmatpush1.msra.mxu0 %v292
    %304 = vmatprep.subr.mxu0 %v295
    %305 = vmatpush1.msra.mxu0 %v294
    %306 = vmatprep.subr.mxu0 %v297
    %307 = vmatpush1.msra.mxu0 %v296
    %308 = vmatprep.subr.mxu0 0.0
    %309 = vmatpush1.msra.mxu0 0.0
    %310 = vmatprep.subr.mxu0 0.0
    %311 = vmatpush1.msra.mxu0 0.0
    %312 = vmatprep.subr.mxu0 0.0
    %313 = vmatpush1.msra.mxu0 0.0
    %314 = vmatprep.subr.mxu0 0.0
    %315 = vmatpush1.msra.mxu0 0.0
    %316 = vmatprep.subr.mxu0 0.0
    %317 = vmatpush1.msra.mxu0 0.0
    %318 = vmatprep.subr.mxu0 0.0
    %319 = vmatpush1.msra.mxu0 0.0
    %320 = vmatprep.subr.mxu0 0.0
    %321 = vmatpush1.msra.mxu0 0.0
    %322 = vmatprep.subr.mxu0 0.0
    %323 = vmatpush1.msra.mxu0 0.0
    %324 = vmatprep.subr.mxu0 0.0
    %325 = vmatpush1.msra.mxu0 0.0
    %326 = vmatprep.subr.mxu0 0.0
    %327 = vmatpush1.msra.mxu0 0.0
    %328 = vmatprep.subr.mxu0 0.0
    %329 = vmatpush1.msra.mxu0 0.0
    %330 = vmatprep.subr.mxu0 0.0
    %331 = vmatpush1.msra.mxu0 0.0
    %332 = vmatprep.subr.mxu0 0.0
    %333 = vmatpush1.msra.mxu0 0.0
    %334 = vmatprep.subr.mxu0 0.0
    %335 = vmatpush1.msra.mxu0 0.0
    %336 = vmatprep.subr.mxu0 0.0
    %337 = vmatpush1.msra.mxu0 0.0
    %338 = vmatprep.subr.mxu0 0.0
    %339 = vmatpush1.msra.mxu0 0.0
    %340 = vmatprep.subr.mxu0 0.0
    %341 = vmatpush1.msra.mxu0 0.0
    %342 = vmatprep.subr.mxu0 0.0
    %343 = vmatpush1.msra.mxu0 0.0
    %344 = vmatprep.subr.mxu0 0.0
    %345 = vmatpush1.msra.mxu0 0.0
    %346 = vmatprep.subr.mxu0 0.0
    %347 = vmatpush1.msra.mxu0 0.0
    %348 = vmatprep.subr.mxu0 0.0
    %349 = vmatpush1.msra.mxu0 0.0
    %350 = vmatprep.subr.mxu0 0.0
    %351 = vmatpush1.msra.mxu0 0.0
    %352 = vmatprep.subr.mxu0 0.0
    %353 = vmatpush1.msra.mxu0 0.0
    %354 = vmatprep.subr.mxu0 0.0
    %355 = vmatpush1.msra.mxu0 0.0
    %356 = vmatprep.subr.mxu0 0.0
    %357 = vmatpush1.msra.mxu0 0.0
    %358 = vmatprep.subr.mxu0 0.0
    %359 = vmatpush1.msra.mxu0 0.0
    %360 = vmatprep.subr.mxu0 0.0
    %361 = vmatpush1.msra.mxu0 0.0
    %362 = vmatprep.subr.mxu0 0.0
    %363 = vmatpush1.msra.mxu0 0.0
    %364 = vmatprep.subr.mxu0 0.0
    %365 = vmatpush1.msra.mxu0 0.0
    %366 = vmatprep.mubr.f32.mxu0 0.0
    %367 = vmatmul.mubr.f32.gmra.mrb[0].mxu0 %v300
    %v368 = vpop.f32.mrb[0].mxu0
    %v369 = vadd.f32 0.0, %v368
    %v370 = vpop.f32.mrb[0].mxu0
    %v371 = vadd.f32 0.0, %v370
    %372 = vdwg.mxu0
    %373 = vmatprep.subr.mxu0 %v261
    %374 = vmatpush1.msra.mxu0 %v260
    %375 = vmatprep.subr.mxu0 %v263
    %376 = vmatpush1.msra.mxu0 %v262
    %377 = vmatprep.subr.mxu0 %v265
    %378 = vmatpush1.msra.mxu0 %v264
    %379 = vmatprep.subr.mxu0 %v267
    %380 = vmatpush1.msra.mxu0 %v266
    %381 = vmatprep.subr.mxu0 %v269
    %382 = vmatpush1.msra.mxu0 %v268
    %383 = vmatprep.subr.mxu0 %v271
    %384 = vmatpush1.msra.mxu0 %v270
    %385 = vmatprep.subr.mxu0 %v273
    %386 = vmatpush1.msra.mxu0 %v272
    %387 = vmatprep.subr.mxu0 %v275
    %388 = vmatpush1.msra.mxu0 %v274
    %389 = vmatprep.subr.mxu0 %v277
    %390 = vmatpush1.msra.mxu0 %v276
    %391 = vmatprep.subr.mxu0 %v279
    %392 = vmatpush1.msra.mxu0 %v278
    %393 = vmatprep.subr.mxu0 %v281
    %394 = vmatpush1.msra.mxu0 %v280
    %395 = vmatprep.subr.mxu0 %v283
    %396 = vmatpush1.msra.mxu0 %v282
    %397 = vmatprep.subr.mxu0 %v285
    %398 = vmatpush1.msra.mxu0 %v284
    %399 = vmatprep.subr.mxu0 %v287
    %400 = vmatpush1.msra.mxu0 %v286
    %401 = vmatprep.subr.mxu0 %v289
    %402 = vmatpush1.msra.mxu0 %v288
    %403 = vmatprep.subr.mxu0 %v291
    %404 = vmatpush1.msra.mxu0 %v290
    %405 = vmatprep.subr.mxu0 0.0
    %406 = vmatpush1.msra.mxu0 0.0
    %407 = vmatprep.subr.mxu0 0.0
    %408 = vmatpush1.msra.mxu0 0.0
    %409 = vmatprep.subr.mxu0 0.0
    %410 = vmatpush1.msra.mxu0 0.0
    %411 = vmatprep.subr.mxu0 0.0
    %412 = vmatpush1.msra.mxu0 0.0
    %413 = vmatprep.subr.mxu0 0.0
    %414 = vmatpush1.msra.mxu0 0.0
    %415 = vmatprep.subr.mxu0 0.0
    %416 = vmatpush1.msra.mxu0 0.0
    %417 = vmatprep.subr.mxu0 0.0
    %418 = vmatpush1.msra.mxu0 0.0
    %419 = vmatprep.subr.mxu0 0.0
    %420 = vmatpush1.msra.mxu0 0.0
    %421 = vmatprep.subr.mxu0 0.0
    %422 = vmatpush1.msra.mxu0 0.0
    %423 = vmatprep.subr.mxu0 0.0
    %424 = vmatpush1.msra.mxu0 0.0
    %425 = vmatprep.subr.mxu0 0.0
    %426 = vmatpush1.msra.mxu0 0.0
    %427 = vmatprep.subr.mxu0 0.0
    %428 = vmatpush1.msra.mxu0 0.0
    %429 = vmatprep.subr.mxu0 0.0
    %430 = vmatpush1.msra.mxu0 0.0
    %431 = vmatprep.subr.mxu0 0.0
    %432 = vmatpush1.msra.mxu0 0.0
    %433 = vmatprep.subr.mxu0 0.0
    %434 = vmatpush1.msra.mxu0 0.0
    %435 = vmatprep.subr.mxu0 0.0
    %436 = vmatpush1.msra.mxu0 0.0
    %437 = vmatprep.mubr.f32.mxu0 0.0
    %438 = vmatmul.mubr.f32.gmra.mrb[0].mxu0 %v243
    %v439 = vpop.f32.mrb[0].mxu0
    %v440 = vadd.f32 %v369, %v439
    %v441 = vpop.f32.mrb[0].mxu0
    %v442 = vadd.f32 %v371, %v441
    %443 = vdwg.mxu0
    %v444 = vld [vmem:[#allocation10] sm:$0x3]
    %v446 = vlaneseq
    %v447 = vshrl.u32 %v446, 7
    %v448 = vsub.s32 0, %v447
    %v449 = vrot.slane %v444, %v448
    %v450 = vlaneseq
    %v451 = vshrl.u32 %v450, 7
    %v452 = vsub.s32 1, %v451
    %v453 = vrot.slane %v444, %v452
    %v456 = vadd.f32 %v440, %v449
    %v457 = vadd.f32 %v442, %v453
    %v458 = vmax.f32 %v456, 0.0
    %v459 = vmax.f32 %v457, 0.0
    %v460 = vld [vmem:[#allocation11] sm:$0xff]
    %v461 = vld [vmem:[#allocation11 + $0x8] sm:$0xff]
    %v462 = vld [vmem:[#allocation11 + $0x10] sm:$0xff]
    %v463 = vld [vmem:[#allocation11 + $0x18] sm:$0xff]
    %v464 = vld [vmem:[#allocation11 + $0x20] sm:$0xff]
    %v465 = vld [vmem:[#allocation11 + $0x28] sm:$0xff]
    %v466 = vld [vmem:[#allocation11 + $0x30] sm:$0xff]
    %v467 = vld [vmem:[#allocation11 + $0x38] sm:$0xff]
    %v468 = vld [vmem:[#allocation11 + $0x40] sm:$0xff]
    %v469 = vld [vmem:[#allocation11 + $0x48] sm:$0xff]
    %v470 = vld [vmem:[#allocation11 + $0x50] sm:$0xff]
    %v471 = vld [vmem:[#allocation11 + $0x58] sm:$0xff]
    %v472 = vld [vmem:[#allocation11 + $0x60] sm:$0xff]
    %v473 = vld [vmem:[#allocation11 + $0x68] sm:$0xff]
    %v474 = vld [vmem:[#allocation11 + $0x70] sm:$0xff]
    %v475 = vld [vmem:[#allocation11 + $0x78] sm:$0xff]
    %v476 = vld [vmem:[#allocation11 + $0x80] sm:$0xff]
    %v477 = vld [vmem:[#allocation11 + $0x88] sm:$0xff]
    %v478 = vld [vmem:[#allocation11 + $0x90] sm:$0xff]
    %v479 = vld [vmem:[#allocation11 + $0x98] sm:$0xff]
    %v480 = vld [vmem:[#allocation11 + $0xa0] sm:$0xff]
    %v481 = vld [vmem:[#allocation11 + $0xa8] sm:$0xff]
    %v482 = vld [vmem:[#allocation11 + $0xb0] sm:$0xff]
    %v483 = vld [vmem:[#allocation11 + $0xb8] sm:$0xff]
    %v484 = vld [vmem:[#allocation11 + $0xc0] sm:$0xff]
    %v485 = vld [vmem:[#allocation11 + $0xc8] sm:$0xff]
    %v486 = vld [vmem:[#allocation11 + $0xd0] sm:$0xff]
    %v487 = vld [vmem:[#allocation11 + $0xd8] sm:$0xff]
    %v488 = vld [vmem:[#allocation11 + $0xe0] sm:$0xff]
    %v489 = vld [vmem:[#allocation11 + $0xe8] sm:$0xff]
    %v490 = vld [vmem:[#allocation11 + $0xf0] sm:$0xff]
    %v491 = vld [vmem:[#allocation11 + $0xf8] sm:$0xff]
    %v492 = vld [vmem:[#allocation11 + $0x100] sm:$0xff]
    %v493 = vld [vmem:[#allocation11 + $0x108] sm:$0xff]
    %v494 = vld [vmem:[#allocation11 + $0x110] sm:$0xff]
    %v495 = vld [vmem:[#allocation11 + $0x118] sm:$0xff]
    %v496 = vld [vmem:[#allocation11 + $0x120] sm:$0xff]
    %v497 = vld [vmem:[#allocation11 + $0x128] sm:$0xff]
    %v498 = vld [vmem:[#allocation11 + $0x130] sm:$0xff]
    %v499 = vld [vmem:[#allocation11 + $0x138] sm:$0xff]
    %v500 = vld [vmem:[#allocation11 + $0x140] sm:$0xff]
    %v501 = vld [vmem:[#allocation11 + $0x148] sm:$0xff]
    %v502 = vld [vmem:[#allocation11 + $0x150] sm:$0xff]
    %v503 = vld [vmem:[#allocation11 + $0x158] sm:$0xff]
    %v504 = vld [vmem:[#allocation11 + $0x160] sm:$0xff]
    %v505 = vld [vmem:[#allocation11 + $0x168] sm:$0xff]
    %v506 = vld [vmem:[#allocation11 + $0x170] sm:$0xff]
    %v507 = vld [vmem:[#allocation11 + $0x178] sm:$0xff]
    %v508 = vld [vmem:[#allocation11 + $0x180] sm:$0xff]
    %v509 = vld [vmem:[#allocation11 + $0x188] sm:$0xff]
    %v510 = vld [vmem:[#allocation11 + $0x190] sm:$0xff]
    %v511 = vld [vmem:[#allocation11 + $0x198] sm:$0xff]
    %v512 = vld [vmem:[#allocation11 + $0x1a0] sm:$0xff]
    %v513 = vld [vmem:[#allocation11 + $0x1a8] sm:$0xff]
    %v514 = vld [vmem:[#allocation11 + $0x1b0] sm:$0xff]
    %v515 = vld [vmem:[#allocation11 + $0x1b8] sm:$0xff]
    %v516 = vld [vmem:[#allocation11 + $0x1c0] sm:$0xff]
    %v517 = vld [vmem:[#allocation11 + $0x1c8] sm:$0xff]
    %v518 = vld [vmem:[#allocation11 + $0x1d0] sm:$0xff]
    %v519 = vld [vmem:[#allocation11 + $0x1d8] sm:$0xff]
    %v520 = vld [vmem:[#allocation11 + $0x1e0] sm:$0xff]
    %v521 = vld [vmem:[#allocation11 + $0x1e8] sm:$0xff]
    %v522 = vld [vmem:[#allocation11 + $0x1f0] sm:$0xff]
    %v523 = vld [vmem:[#allocation11 + $0x1f8] sm:$0xff]
    %v524 = vld [vmem:[#allocation13] sm:$0x3]
    %v526 = vlaneseq
    %v527 = vshrl.u32 %v526, 7
    %v528 = vsub.s32 0, %v527
    %v529 = vrot.slane %v524, %v528
    %v530 = vlaneseq
    %v531 = vshrl.u32 %v530, 7
    %v532 = vsub.s32 1, %v531
    %v533 = vrot.slane %v524, %v532
    %536 = vmatprep.subr.mxu0 %v461
    %537 = vmatpush1.msra.mxu0 %v460
    %538 = vmatprep.subr.mxu0 %v463
    %539 = vmatpush1.msra.mxu0 %v462
    %540 = vmatprep.subr.mxu0 %v465
    %541 = vmatpush1.msra.mxu0 %v464
    %542 = vmatprep.subr.mxu0 %v467
    %543 = vmatpush1.msra.mxu0 %v466
    %544 = vmatprep.subr.mxu0 %v469
    %545 = vmatpush1.msra.mxu0 %v468
    %546 = vmatprep.subr.mxu0 %v471
    %547 = vmatpush1.msra.mxu0 %v470
    %548 = vmatprep.subr.mxu0 %v473
    %549 = vmatpush1.msra.mxu0 %v472
    %550 = vmatprep.subr.mxu0 %v475
    %551 = vmatpush1.msra.mxu0 %v474
    %552 = vmatprep.subr.mxu0 %v477
    %553 = vmatpush1.msra.mxu0 %v476
    %554 = vmatprep.subr.mxu0 %v479
    %555 = vmatpush1.msra.mxu0 %v478
    %556 = vmatprep.subr.mxu0 %v481
    %557 = vmatpush1.msra.mxu0 %v480
    %558 = vmatprep.subr.mxu0 %v483
    %559 = vmatpush1.msra.mxu0 %v482
    %560 = vmatprep.subr.mxu0 %v485
    %561 = vmatpush1.msra.mxu0 %v484
    %562 = vmatprep.subr.mxu0 %v487
    %563 = vmatpush1.msra.mxu0 %v486
    %564 = vmatprep.subr.mxu0 %v489
    %565 = vmatpush1.msra.mxu0 %v488
    %566 = vmatprep.subr.mxu0 %v491
    %567 = vmatpush1.msra.mxu0 %v490
    %568 = vmatprep.subr.mxu0 %v493
    %569 = vmatpush1.msra.mxu0 %v492
    %570 = vmatprep.subr.mxu0 %v495
    %571 = vmatpush1.msra.mxu0 %v494
    %572 = vmatprep.subr.mxu0 %v497
    %573 = vmatpush1.msra.mxu0 %v496
    %574 = vmatprep.subr.mxu0 %v499
    %575 = vmatpush1.msra.mxu0 %v498
    %576 = vmatprep.subr.mxu0 %v501
    %577 = vmatpush1.msra.mxu0 %v500
    %578 = vmatprep.subr.mxu0 %v503
    %579 = vmatpush1.msra.mxu0 %v502
    %580 = vmatprep.subr.mxu0 %v505
    %581 = vmatpush1.msra.mxu0 %v504
    %582 = vmatprep.subr.mxu0 %v507
    %583 = vmatpush1.msra.mxu0 %v506
    %584 = vmatprep.subr.mxu0 %v509
    %585 = vmatpush1.msra.mxu0 %v508
    %586 = vmatprep.subr.mxu0 %v511
    %587 = vmatpush1.msra.mxu0 %v510
    %588 = vmatprep.subr.mxu0 %v513
    %589 = vmatpush1.msra.mxu0 %v512
    %590 = vmatprep.subr.mxu0 %v515
    %591 = vmatpush1.msra.mxu0 %v514
    %592 = vmatprep.subr.mxu0 %v517
    %593 = vmatpush1.msra.mxu0 %v516
    %594 = vmatprep.subr.mxu0 %v519
    %595 = vmatpush1.msra.mxu0 %v518
    %596 = vmatprep.subr.mxu0 %v521
    %597 = vmatpush1.msra.mxu0 %v520
    %598 = vmatprep.subr.mxu0 %v523
    %599 = vmatpush1.msra.mxu0 %v522
    %600 = vmatprep.mubr.f32.mxu0 %v459
    %601 = vmatmul.mubr.f32.gmra.mrb[0].mxu0 %v458
    %v602 = vpop.f32.mrb[0].mxu0
    %v603 = vadd.f32 %v529, %v602
    %v604 = vpop.f32.mrb[0].mxu0
    %v605 = vadd.f32 %v533, %v604
    %606 = vdwg.mxu0
    %v607 = vmax.f32 %v603, 0.0
    %v608 = vmax.f32 %v605, 0.0
    %s609 = scalar_lea.vmem [#allocation11], 512
    %v610 = vld [vmem:[%s609] sm:$0xff]
    %v611 = vld [vmem:[%s609 + $0x8] sm:$0xff]
    %v612 = vld [vmem:[%s609 + $0x10] sm:$0xff]
    %v613 = vld [vmem:[%s609 + $0x18] sm:$0xff]
    %v614 = vld [vmem:[%s609 + $0x20] sm:$0xff]
    %v615 = vld [vmem:[%s609 + $0x28] sm:$0xff]
    %v616 = vld [vmem:[%s609 + $0x30] sm:$0xff]
    %v617 = vld [vmem:[%s609 + $0x38] sm:$0xff]
    %v618 = vld [vmem:[%s609 + $0x40] sm:$0xff]
    %v619 = vld [vmem:[%s609 + $0x48] sm:$0xff]
    %v620 = vld [vmem:[%s609 + $0x50] sm:$0xff]
    %v621 = vld [vmem:[%s609 + $0x58] sm:$0xff]
    %v622 = vld [vmem:[%s609 + $0x60] sm:$0xff]
    %v623 = vld [vmem:[%s609 + $0x68] sm:$0xff]
    %v624 = vld [vmem:[%s609 + $0x70] sm:$0xff]
    %v625 = vld [vmem:[%s609 + $0x78] sm:$0xff]
    %v626 = vld [vmem:[%s609 + $0x80] sm:$0xff]
    %v627 = vld [vmem:[%s609 + $0x88] sm:$0xff]
    %v628 = vld [vmem:[%s609 + $0x90] sm:$0xff]
    %v629 = vld [vmem:[%s609 + $0x98] sm:$0xff]
    %v630 = vld [vmem:[%s609 + $0xa0] sm:$0xff]
    %v631 = vld [vmem:[%s609 + $0xa8] sm:$0xff]
    %v632 = vld [vmem:[%s609 + $0xb0] sm:$0xff]
    %v633 = vld [vmem:[%s609 + $0xb8] sm:$0xff]
    %v634 = vld [vmem:[%s609 + $0xc0] sm:$0xff]
    %v635 = vld [vmem:[%s609 + $0xc8] sm:$0xff]
    %v636 = vld [vmem:[%s609 + $0xd0] sm:$0xff]
    %v637 = vld [vmem:[%s609 + $0xd8] sm:$0xff]
    %v638 = vld [vmem:[%s609 + $0xe0] sm:$0xff]
    %v639 = vld [vmem:[%s609 + $0xe8] sm:$0xff]
    %v640 = vld [vmem:[%s609 + $0xf0] sm:$0xff]
    %v641 = vld [vmem:[%s609 + $0xf8] sm:$0xff]
    %v642 = vld [vmem:[%s609 + $0x100] sm:$0xff]
    %v643 = vld [vmem:[%s609 + $0x108] sm:$0xff]
    %v644 = vld [vmem:[%s609 + $0x110] sm:$0xff]
    %v645 = vld [vmem:[%s609 + $0x118] sm:$0xff]
    %v646 = vld [vmem:[%s609 + $0x120] sm:$0xff]
    %v647 = vld [vmem:[%s609 + $0x128] sm:$0xff]
    %v648 = vld [vmem:[%s609 + $0x130] sm:$0xff]
    %v649 = vld [vmem:[%s609 + $0x138] sm:$0xff]
    %v650 = vld [vmem:[%s609 + $0x140] sm:$0xff]
    %v651 = vld [vmem:[%s609 + $0x148] sm:$0xff]
    %v652 = vld [vmem:[%s609 + $0x150] sm:$0xff]
    %v653 = vld [vmem:[%s609 + $0x158] sm:$0xff]
    %v654 = vld [vmem:[%s609 + $0x160] sm:$0xff]
    %v655 = vld [vmem:[%s609 + $0x168] sm:$0xff]
    %v656 = vld [vmem:[%s609 + $0x170] sm:$0xff]
    %v657 = vld [vmem:[%s609 + $0x178] sm:$0xff]
    %v658 = vld [vmem:[%s609 + $0x180] sm:$0xff]
    %v659 = vld [vmem:[%s609 + $0x188] sm:$0xff]
    %v660 = vld [vmem:[%s609 + $0x190] sm:$0xff]
    %v661 = vld [vmem:[%s609 + $0x198] sm:$0xff]
    %v662 = vld [vmem:[%s609 + $0x1a0] sm:$0xff]
    %v663 = vld [vmem:[%s609 + $0x1a8] sm:$0xff]
    %v664 = vld [vmem:[%s609 + $0x1b0] sm:$0xff]
    %v665 = vld [vmem:[%s609 + $0x1b8] sm:$0xff]
    %v666 = vld [vmem:[%s609 + $0x1c0] sm:$0xff]
    %v667 = vld [vmem:[%s609 + $0x1c8] sm:$0xff]
    %v668 = vld [vmem:[%s609 + $0x1d0] sm:$0xff]
    %v669 = vld [vmem:[%s609 + $0x1d8] sm:$0xff]
    %v670 = vld [vmem:[%s609 + $0x1e0] sm:$0xff]
    %v671 = vld [vmem:[%s609 + $0x1e8] sm:$0xff]
    %v672 = vld [vmem:[%s609 + $0x1f0] sm:$0xff]
    %v673 = vld [vmem:[%s609 + $0x1f8] sm:$0xff]
    %s674 = scalar_lea.vmem [#allocation13], 2
    %v675 = vld [vmem:[%s674] sm:$0x3]
    %v677 = vlaneseq
    %v678 = vshrl.u32 %v677, 7
    %v679 = vsub.s32 0, %v678
    %v680 = vrot.slane %v675, %v679
    %v681 = vlaneseq
    %v682 = vshrl.u32 %v681, 7
    %v683 = vsub.s32 1, %v682
    %v684 = vrot.slane %v675, %v683
    %687 = vmatprep.subr.mxu0 %v611
    %688 = vmatpush1.msra.mxu0 %v610
    %689 = vmatprep.subr.mxu0 %v613
    %690 = vmatpush1.msra.mxu0 %v612
    %691 = vmatprep.subr.mxu0 %v615
    %692 = vmatpush1.msra.mxu0 %v614
    %693 = vmatprep.subr.mxu0 %v617
    %694 = vmatpush1.msra.mxu0 %v616
    %695 = vmatprep.subr.mxu0 %v619
    %696 = vmatpush1.msra.mxu0 %v618
    %697 = vmatprep.subr.mxu0 %v621
    %698 = vmatpush1.msra.mxu0 %v620
    %699 = vmatprep.subr.mxu0 %v623
    %700 = vmatpush1.msra.mxu0 %v622
    %701 = vmatprep.subr.mxu0 %v625
    %702 = vmatpush1.msra.mxu0 %v624
    %703 = vmatprep.subr.mxu0 %v627
    %704 = vmatpush1.msra.mxu0 %v626
    %705 = vmatprep.subr.mxu0 %v629
    %706 = vmatpush1.msra.mxu0 %v628
    %707 = vmatprep.subr.mxu0 %v631
    %708 = vmatpush1.msra.mxu0 %v630
    %709 = vmatprep.subr.mxu0 %v633
    %710 = vmatpush1.msra.mxu0 %v632
    %711 = vmatprep.subr.mxu0 %v635
    %712 = vmatpush1.msra.mxu0 %v634
    %713 = vmatprep.subr.mxu0 %v637
    %714 = vmatpush1.msra.mxu0 %v636
    %715 = vmatprep.subr.mxu0 %v639
    %716 = vmatpush1.msra.mxu0 %v638
    %717 = vmatprep.subr.mxu0 %v641
    %718 = vmatpush1.msra.mxu0 %v640
    %719 = vmatprep.subr.mxu0 %v643
    %720 = vmatpush1.msra.mxu0 %v642
    %721 = vmatprep.subr.mxu0 %v645
    %722 = vmatpush1.msra.mxu0 %v644
    %723 = vmatprep.subr.mxu0 %v647
    %724 = vmatpush1.msra.mxu0 %v646
    %725 = vmatprep.subr.mxu0 %v649
    %726 = vmatpush1.msra.mxu0 %v648
    %727 = vmatprep.subr.mxu0 %v651
    %728 = vmatpush1.msra.mxu0 %v650
    %729 = vmatprep.subr.mxu0 %v653
    %730 = vmatpush1.msra.mxu0 %v652
    %731 = vmatprep.subr.mxu0 %v655
    %732 = vmatpush1.msra.mxu0 %v654
    %733 = vmatprep.subr.mxu0 %v657
    %734 = vmatpush1.msra.mxu0 %v656
    %735 = vmatprep.subr.mxu0 %v659
    %736 = vmatpush1.msra.mxu0 %v658
    %737 = vmatprep.subr.mxu0 %v661
    %738 = vmatpush1.msra.mxu0 %v660
    %739 = vmatprep.subr.mxu0 %v663
    %740 = vmatpush1.msra.mxu0 %v662
    %741 = vmatprep.subr.mxu0 %v665
    %742 = vmatpush1.msra.mxu0 %v664
    %743 = vmatprep.subr.mxu0 %v667
    %744 = vmatpush1.msra.mxu0 %v666
    %745 = vmatprep.subr.mxu0 %v669
    %746 = vmatpush1.msra.mxu0 %v668
    %747 = vmatprep.subr.mxu0 %v671
    %748 = vmatpush1.msra.mxu0 %v670
    %749 = vmatprep.subr.mxu0 %v673
    %750 = vmatpush1.msra.mxu0 %v672
    %751 = vmatprep.mubr.f32.mxu0 %v608
    %752 = vmatmul.mubr.f32.gmra.mrb[0].mxu0 %v607
    %v753 = vpop.f32.mrb[0].mxu0
    %v754 = vadd.f32 %v680, %v753
    %v755 = vpop.f32.mrb[0].mxu0
    %v756 = vadd.f32 %v684, %v755
    %757 = vdwg.mxu0
    %v758 = vmax.f32 %v754, 0.0
    %v759 = vmax.f32 %v756, 0.0
    %s760 = scalar_lea.vmem [#allocation11], 1024
    %v761 = vld [vmem:[%s760] sm:$0xff]
    %v762 = vld [vmem:[%s760 + $0x8] sm:$0xff]
    %v763 = vld [vmem:[%s760 + $0x10] sm:$0xff]
    %v764 = vld [vmem:[%s760 + $0x18] sm:$0xff]
    %v765 = vld [vmem:[%s760 + $0x20] sm:$0xff]
    %v766 = vld [vmem:[%s760 + $0x28] sm:$0xff]
    %v767 = vld [vmem:[%s760 + $0x30] sm:$0xff]
    %v768 = vld [vmem:[%s760 + $0x38] sm:$0xff]
    %v769 = vld [vmem:[%s760 + $0x40] sm:$0xff]
    %v770 = vld [vmem:[%s760 + $0x48] sm:$0xff]
    %v771 = vld [vmem:[%s760 + $0x50] sm:$0xff]
    %v772 = vld [vmem:[%s760 + $0x58] sm:$0xff]
    %v773 = vld [vmem:[%s760 + $0x60] sm:$0xff]
    %v774 = vld [vmem:[%s760 + $0x68] sm:$0xff]
    %v775 = vld [vmem:[%s760 + $0x70] sm:$0xff]
    %v776 = vld [vmem:[%s760 + $0x78] sm:$0xff]
    %v777 = vld [vmem:[%s760 + $0x80] sm:$0xff]
    %v778 = vld [vmem:[%s760 + $0x88] sm:$0xff]
    %v779 = vld [vmem:[%s760 + $0x90] sm:$0xff]
    %v780 = vld [vmem:[%s760 + $0x98] sm:$0xff]
    %v781 = vld [vmem:[%s760 + $0xa0] sm:$0xff]
    %v782 = vld [vmem:[%s760 + $0xa8] sm:$0xff]
    %v783 = vld [vmem:[%s760 + $0xb0] sm:$0xff]
    %v784 = vld [vmem:[%s760 + $0xb8] sm:$0xff]
    %v785 = vld [vmem:[%s760 + $0xc0] sm:$0xff]
    %v786 = vld [vmem:[%s760 + $0xc8] sm:$0xff]
    %v787 = vld [vmem:[%s760 + $0xd0] sm:$0xff]
    %v788 = vld [vmem:[%s760 + $0xd8] sm:$0xff]
    %v789 = vld [vmem:[%s760 + $0xe0] sm:$0xff]
    %v790 = vld [vmem:[%s760 + $0xe8] sm:$0xff]
    %v791 = vld [vmem:[%s760 + $0xf0] sm:$0xff]
    %v792 = vld [vmem:[%s760 + $0xf8] sm:$0xff]
    %v793 = vld [vmem:[%s760 + $0x100] sm:$0xff]
    %v794 = vld [vmem:[%s760 + $0x108] sm:$0xff]
    %v795 = vld [vmem:[%s760 + $0x110] sm:$0xff]
    %v796 = vld [vmem:[%s760 + $0x118] sm:$0xff]
    %v797 = vld [vmem:[%s760 + $0x120] sm:$0xff]
    %v798 = vld [vmem:[%s760 + $0x128] sm:$0xff]
    %v799 = vld [vmem:[%s760 + $0x130] sm:$0xff]
    %v800 = vld [vmem:[%s760 + $0x138] sm:$0xff]
    %v801 = vld [vmem:[%s760 + $0x140] sm:$0xff]
    %v802 = vld [vmem:[%s760 + $0x148] sm:$0xff]
    %v803 = vld [vmem:[%s760 + $0x150] sm:$0xff]
    %v804 = vld [vmem:[%s760 + $0x158] sm:$0xff]
    %v805 = vld [vmem:[%s760 + $0x160] sm:$0xff]
    %v806 = vld [vmem:[%s760 + $0x168] sm:$0xff]
    %v807 = vld [vmem:[%s760 + $0x170] sm:$0xff]
    %v808 = vld [vmem:[%s760 + $0x178] sm:$0xff]
    %v809 = vld [vmem:[%s760 + $0x180] sm:$0xff]
    %v810 = vld [vmem:[%s760 + $0x188] sm:$0xff]
    %v811 = vld [vmem:[%s760 + $0x190] sm:$0xff]
    %v812 = vld [vmem:[%s760 + $0x198] sm:$0xff]
    %v813 = vld [vmem:[%s760 + $0x1a0] sm:$0xff]
    %v814 = vld [vmem:[%s760 + $0x1a8] sm:$0xff]
    %v815 = vld [vmem:[%s760 + $0x1b0] sm:$0xff]
    %v816 = vld [vmem:[%s760 + $0x1b8] sm:$0xff]
    %v817 = vld [vmem:[%s760 + $0x1c0] sm:$0xff]
    %v818 = vld [vmem:[%s760 + $0x1c8] sm:$0xff]
    %v819 = vld [vmem:[%s760 + $0x1d0] sm:$0xff]
    %v820 = vld [vmem:[%s760 + $0x1d8] sm:$0xff]
    %v821 = vld [vmem:[%s760 + $0x1e0] sm:$0xff]
    %v822 = vld [vmem:[%s760 + $0x1e8] sm:$0xff]
    %v823 = vld [vmem:[%s760 + $0x1f0] sm:$0xff]
    %v824 = vld [vmem:[%s760 + $0x1f8] sm:$0xff]
    %s825 = scalar_lea.vmem [#allocation13], 4
    %v826 = vld [vmem:[%s825] sm:$0x3]
    %v828 = vlaneseq
    %v829 = vshrl.u32 %v828, 7
    %v830 = vsub.s32 0, %v829
    %v831 = vrot.slane %v826, %v830
    %v832 = vlaneseq
    %v833 = vshrl.u32 %v832, 7
    %v834 = vsub.s32 1, %v833
    %v835 = vrot.slane %v826, %v834
    %838 = vmatprep.subr.mxu0 %v762
    %839 = vmatpush1.msra.mxu0 %v761
    %840 = vmatprep.subr.mxu0 %v764
    %841 = vmatpush1.msra.mxu0 %v763
    %842 = vmatprep.subr.mxu0 %v766
    %843 = vmatpush1.msra.mxu0 %v765
    %844 = vmatprep.subr.mxu0 %v768
    %845 = vmatpush1.msra.mxu0 %v767
    %846 = vmatprep.subr.mxu0 %v770
    %847 = vmatpush1.msra.mxu0 %v769
    %848 = vmatprep.subr.mxu0 %v772
    %849 = vmatpush1.msra.mxu0 %v771
    %850 = vmatprep.subr.mxu0 %v774
    %851 = vmatpush1.msra.mxu0 %v773
    %852 = vmatprep.subr.mxu0 %v776
    %853 = vmatpush1.msra.mxu0 %v775
    %854 = vmatprep.subr.mxu0 %v778
    %855 = vmatpush1.msra.mxu0 %v777
    %856 = vmatprep.subr.mxu0 %v780
    %857 = vmatpush1.msra.mxu0 %v779
    %858 = vmatprep.subr.mxu0 %v782
    %859 = vmatpush1.msra.mxu0 %v781
    %860 = vmatprep.subr.mxu0 %v784
    %861 = vmatpush1.msra.mxu0 %v783
    %862 = vmatprep.subr.mxu0 %v786
    %863 = vmatpush1.msra.mxu0 %v785
    %864 = vmatprep.subr.mxu0 %v788
    %865 = vmatpush1.msra.mxu0 %v787
    %866 = vmatprep.subr.mxu0 %v790
    %867 = vmatpush1.msra.mxu0 %v789
    %868 = vmatprep.subr.mxu0 %v792
    %869 = vmatpush1.msra.mxu0 %v791
    %870 = vmatprep.subr.mxu0 %v794
    %871 = vmatpush1.msra.mxu0 %v793
    %872 = vmatprep.subr.mxu0 %v796
    %873 = vmatpush1.msra.mxu0 %v795
    %874 = vmatprep.subr.mxu0 %v798
    %875 = vmatpush1.msra.mxu0 %v797
    %876 = vmatprep.subr.mxu0 %v800
    %877 = vmatpush1.msra.mxu0 %v799
    %878 = vmatprep.subr.mxu0 %v802
    %879 = vmatpush1.msra.mxu0 %v801
    %880 = vmatprep.subr.mxu0 %v804
    %881 = vmatpush1.msra.mxu0 %v803
    %882 = vmatprep.subr.mxu0 %v806
    %883 = vmatpush1.msra.mxu0 %v805
    %884 = vmatprep.subr.mxu0 %v808
    %885 = vmatpush1.msra.mxu0 %v807
    %886 = vmatprep.subr.mxu0 %v810
    %887 = vmatpush1.msra.mxu0 %v809
    %888 = vmatprep.subr.mxu0 %v812
    %889 = vmatpush1.msra.mxu0 %v811
    %890 = vmatprep.subr.mxu0 %v814
    %891 = vmatpush1.msra.mxu0 %v813
    %892 = vmatprep.subr.mxu0 %v816
    %893 = vmatpush1.msra.mxu0 %v815
    %894 = vmatprep.subr.mxu0 %v818
    %895 = vmatpush1.msra.mxu0 %v817
    %896 = vmatprep.subr.mxu0 %v820
    %897 = vmatpush1.msra.mxu0 %v819
    %898 = vmatprep.subr.mxu0 %v822
    %899 = vmatpush1.msra.mxu0 %v821
    %900 = vmatprep.subr.mxu0 %v824
    %901 = vmatpush1.msra.mxu0 %v823
    %902 = vmatprep.mubr.f32.mxu0 %v759
    %903 = vmatmul.mubr.f32.gmra.mrb[0].mxu0 %v758
    %v904 = vpop.f32.mrb[0].mxu0
    %v905 = vadd.f32 %v831, %v904
    %v906 = vpop.f32.mrb[0].mxu0
    %v907 = vadd.f32 %v835, %v906
    %908 = vdwg.mxu0
    %v909 = vmax.f32 %v905, 0.0
    %v910 = vmax.f32 %v907, 0.0
    %s911 = scalar_lea.vmem [#allocation11], 1536
    %v912 = vld [vmem:[%s911] sm:$0xff]
    %v913 = vld [vmem:[%s911 + $0x8] sm:$0xff]
    %v914 = vld [vmem:[%s911 + $0x10] sm:$0xff]
    %v915 = vld [vmem:[%s911 + $0x18] sm:$0xff]
    %v916 = vld [vmem:[%s911 + $0x20] sm:$0xff]
    %v917 = vld [vmem:[%s911 + $0x28] sm:$0xff]
    %v918 = vld [vmem:[%s911 + $0x30] sm:$0xff]
    %v919 = vld [vmem:[%s911 + $0x38] sm:$0xff]
    %v920 = vld [vmem:[%s911 + $0x40] sm:$0xff]
    %v921 = vld [vmem:[%s911 + $0x48] sm:$0xff]
    %v922 = vld [vmem:[%s911 + $0x50] sm:$0xff]
    %v923 = vld [vmem:[%s911 + $0x58] sm:$0xff]
    %v924 = vld [vmem:[%s911 + $0x60] sm:$0xff]
    %v925 = vld [vmem:[%s911 + $0x68] sm:$0xff]
    %v926 = vld [vmem:[%s911 + $0x70] sm:$0xff]
    %v927 = vld [vmem:[%s911 + $0x78] sm:$0xff]
    %v928 = vld [vmem:[%s911 + $0x80] sm:$0xff]
    %v929 = vld [vmem:[%s911 + $0x88] sm:$0xff]
    %v930 = vld [vmem:[%s911 + $0x90] sm:$0xff]
    %v931 = vld [vmem:[%s911 + $0x98] sm:$0xff]
    %v932 = vld [vmem:[%s911 + $0xa0] sm:$0xff]
    %v933 = vld [vmem:[%s911 + $0xa8] sm:$0xff]
    %v934 = vld [vmem:[%s911 + $0xb0] sm:$0xff]
    %v935 = vld [vmem:[%s911 + $0xb8] sm:$0xff]
    %v936 = vld [vmem:[%s911 + $0xc0] sm:$0xff]
    %v937 = vld [vmem:[%s911 + $0xc8] sm:$0xff]
    %v938 = vld [vmem:[%s911 + $0xd0] sm:$0xff]
    %v939 = vld [vmem:[%s911 + $0xd8] sm:$0xff]
    %v940 = vld [vmem:[%s911 + $0xe0] sm:$0xff]
    %v941 = vld [vmem:[%s911 + $0xe8] sm:$0xff]
    %v942 = vld [vmem:[%s911 + $0xf0] sm:$0xff]
    %v943 = vld [vmem:[%s911 + $0xf8] sm:$0xff]
    %v944 = vld [vmem:[%s911 + $0x100] sm:$0xff]
    %v945 = vld [vmem:[%s911 + $0x108] sm:$0xff]
    %v946 = vld [vmem:[%s911 + $0x110] sm:$0xff]
    %v947 = vld [vmem:[%s911 + $0x118] sm:$0xff]
    %v948 = vld [vmem:[%s911 + $0x120] sm:$0xff]
    %v949 = vld [vmem:[%s911 + $0x128] sm:$0xff]
    %v950 = vld [vmem:[%s911 + $0x130] sm:$0xff]
    %v951 = vld [vmem:[%s911 + $0x138] sm:$0xff]
    %v952 = vld [vmem:[%s911 + $0x140] sm:$0xff]
    %v953 = vld [vmem:[%s911 + $0x148] sm:$0xff]
    %v954 = vld [vmem:[%s911 + $0x150] sm:$0xff]
    %v955 = vld [vmem:[%s911 + $0x158] sm:$0xff]
    %v956 = vld [vmem:[%s911 + $0x160] sm:$0xff]
    %v957 = vld [vmem:[%s911 + $0x168] sm:$0xff]
    %v958 = vld [vmem:[%s911 + $0x170] sm:$0xff]
    %v959 = vld [vmem:[%s911 + $0x178] sm:$0xff]
    %v960 = vld [vmem:[%s911 + $0x180] sm:$0xff]
    %v961 = vld [vmem:[%s911 + $0x188] sm:$0xff]
    %v962 = vld [vmem:[%s911 + $0x190] sm:$0xff]
    %v963 = vld [vmem:[%s911 + $0x198] sm:$0xff]
    %v964 = vld [vmem:[%s911 + $0x1a0] sm:$0xff]
    %v965 = vld [vmem:[%s911 + $0x1a8] sm:$0xff]
    %v966 = vld [vmem:[%s911 + $0x1b0] sm:$0xff]
    %v967 = vld [vmem:[%s911 + $0x1b8] sm:$0xff]
    %v968 = vld [vmem:[%s911 + $0x1c0] sm:$0xff]
    %v969 = vld [vmem:[%s911 + $0x1c8] sm:$0xff]
    %v970 = vld [vmem:[%s911 + $0x1d0] sm:$0xff]
    %v971 = vld [vmem:[%s911 + $0x1d8] sm:$0xff]
    %v972 = vld [vmem:[%s911 + $0x1e0] sm:$0xff]
    %v973 = vld [vmem:[%s911 + $0x1e8] sm:$0xff]
    %v974 = vld [vmem:[%s911 + $0x1f0] sm:$0xff]
    %v975 = vld [vmem:[%s911 + $0x1f8] sm:$0xff]
    %s976 = scalar_lea.vmem [#allocation13], 6
    %v977 = vld [vmem:[%s976] sm:$0x3]
    %v979 = vlaneseq
    %v980 = vshrl.u32 %v979, 7
    %v981 = vsub.s32 0, %v980
    %v982 = vrot.slane %v977, %v981
    %v983 = vlaneseq
    %v984 = vshrl.u32 %v983, 7
    %v985 = vsub.s32 1, %v984
    %v986 = vrot.slane %v977, %v985
    %989 = vmatprep.subr.mxu0 %v913
    %990 = vmatpush1.msra.mxu0 %v912
    %991 = vmatprep.subr.mxu0 %v915
    %992 = vmatpush1.msra.mxu0 %v914
    %993 = vmatprep.subr.mxu0 %v917
    %994 = vmatpush1.msra.mxu0 %v916
    %995 = vmatprep.subr.mxu0 %v919
    %996 = vmatpush1.msra.mxu0 %v918
    %997 = vmatprep.subr.mxu0 %v921
    %998 = vmatpush1.msra.mxu0 %v920
    %999 = vmatprep.subr.mxu0 %v923
    %1000 = vmatpush1.msra.mxu0 %v922
    %1001 = vmatprep.subr.mxu0 %v925
    %1002 = vmatpush1.msra.mxu0 %v924
    %1003 = vmatprep.subr.mxu0 %v927
    %1004 = vmatpush1.msra.mxu0 %v926
    %1005 = vmatprep.subr.mxu0 %v929
    %1006 = vmatpush1.msra.mxu0 %v928
    %1007 = vmatprep.subr.mxu0 %v931
    %1008 = vmatpush1.msra.mxu0 %v930
    %1009 = vmatprep.subr.mxu0 %v933
    %1010 = vmatpush1.msra.mxu0 %v932
    %1011 = vmatprep.subr.mxu0 %v935
    %1012 = vmatpush1.msra.mxu0 %v934
    %1013 = vmatprep.subr.mxu0 %v937
    %1014 = vmatpush1.msra.mxu0 %v936
    %1015 = vmatprep.subr.mxu0 %v939
    %1016 = vmatpush1.msra.mxu0 %v938
    %1017 = vmatprep.subr.mxu0 %v941
    %1018 = vmatpush1.msra.mxu0 %v940
    %1019 = vmatprep.subr.mxu0 %v943
    %1020 = vmatpush1.msra.mxu0 %v942
    %1021 = vmatprep.subr.mxu0 %v945
    %1022 = vmatpush1.msra.mxu0 %v944
    %1023 = vmatprep.subr.mxu0 %v947
    %1024 = vmatpush1.msra.mxu0 %v946
    %1025 = vmatprep.subr.mxu0 %v949
    %1026 = vmatpush1.msra.mxu0 %v948
    %1027 = vmatprep.subr.mxu0 %v951
    %1028 = vmatpush1.msra.mxu0 %v950
    %1029 = vmatprep.subr.mxu0 %v953
    %1030 = vmatpush1.msra.mxu0 %v952
    %1031 = vmatprep.subr.mxu0 %v955
    %1032 = vmatpush1.msra.mxu0 %v954
    %1033 = vmatprep.subr.mxu0 %v957
    %1034 = vmatpush1.msra.mxu0 %v956
    %1035 = vmatprep.subr.mxu0 %v959
    %1036 = vmatpush1.msra.mxu0 %v958
    %1037 = vmatprep.subr.mxu0 %v961
    %1038 = vmatpush1.msra.mxu0 %v960
    %1039 = vmatprep.subr.mxu0 %v963
    %1040 = vmatpush1.msra.mxu0 %v962
    %1041 = vmatprep.subr.mxu0 %v965
    %1042 = vmatpush1.msra.mxu0 %v964
    %1043 = vmatprep.subr.mxu0 %v967
    %1044 = vmatpush1.msra.mxu0 %v966
    %1045 = vmatprep.subr.mxu0 %v969
    %1046 = vmatpush1.msra.mxu0 %v968
    %1047 = vmatprep.subr.mxu0 %v971
    %1048 = vmatpush1.msra.mxu0 %v970
    %1049 = vmatprep.subr.mxu0 %v973
    %1050 = vmatpush1.msra.mxu0 %v972
    %1051 = vmatprep.subr.mxu0 %v975
    %1052 = vmatpush1.msra.mxu0 %v974
    %1053 = vmatprep.mubr.f32.mxu0 %v910
    %1054 = vmatmul.mubr.f32.gmra.mrb[0].mxu0 %v909
    %v1055 = vpop.f32.mrb[0].mxu0
    %v1056 = vadd.f32 %v982, %v1055
    %v1057 = vpop.f32.mrb[0].mxu0
    %v1058 = vadd.f32 %v986, %v1057
    %1059 = vdwg.mxu0
    %v1060 = vmax.f32 %v1056, 0.0
    %v1061 = vmax.f32 %v1058, 0.0
    %s1062 = scalar_lea.vmem [#allocation11], 2048
    %v1063 = vld [vmem:[%s1062] sm:$0xff]
    %v1064 = vld [vmem:[%s1062 + $0x8] sm:$0xff]
    %v1065 = vld [vmem:[%s1062 + $0x10] sm:$0xff]
    %v1066 = vld [vmem:[%s1062 + $0x18] sm:$0xff]
    %v1067 = vld [vmem:[%s1062 + $0x20] sm:$0xff]
    %v1068 = vld [vmem:[%s1062 + $0x28] sm:$0xff]
    %v1069 = vld [vmem:[%s1062 + $0x30] sm:$0xff]
    %v1070 = vld [vmem:[%s1062 + $0x38] sm:$0xff]
    %v1071 = vld [vmem:[%s1062 + $0x40] sm:$0xff]
    %v1072 = vld [vmem:[%s1062 + $0x48] sm:$0xff]
    %v1073 = vld [vmem:[%s1062 + $0x50] sm:$0xff]
    %v1074 = vld [vmem:[%s1062 + $0x58] sm:$0xff]
    %v1075 = vld [vmem:[%s1062 + $0x60] sm:$0xff]
    %v1076 = vld [vmem:[%s1062 + $0x68] sm:$0xff]
    %v1077 = vld [vmem:[%s1062 + $0x70] sm:$0xff]
    %v1078 = vld [vmem:[%s1062 + $0x78] sm:$0xff]
    %v1079 = vld [vmem:[%s1062 + $0x80] sm:$0xff]
    %v1080 = vld [vmem:[%s1062 + $0x88] sm:$0xff]
    %v1081 = vld [vmem:[%s1062 + $0x90] sm:$0xff]
    %v1082 = vld [vmem:[%s1062 + $0x98] sm:$0xff]
    %v1083 = vld [vmem:[%s1062 + $0xa0] sm:$0xff]
    %v1084 = vld [vmem:[%s1062 + $0xa8] sm:$0xff]
    %v1085 = vld [vmem:[%s1062 + $0xb0] sm:$0xff]
    %v1086 = vld [vmem:[%s1062 + $0xb8] sm:$0xff]
    %v1087 = vld [vmem:[%s1062 + $0xc0] sm:$0xff]
    %v1088 = vld [vmem:[%s1062 + $0xc8] sm:$0xff]
    %v1089 = vld [vmem:[%s1062 + $0xd0] sm:$0xff]
    %v1090 = vld [vmem:[%s1062 + $0xd8] sm:$0xff]
    %v1091 = vld [vmem:[%s1062 + $0xe0] sm:$0xff]
    %v1092 = vld [vmem:[%s1062 + $0xe8] sm:$0xff]
    %v1093 = vld [vmem:[%s1062 + $0xf0] sm:$0xff]
    %v1094 = vld [vmem:[%s1062 + $0xf8] sm:$0xff]
    %v1095 = vld [vmem:[%s1062 + $0x100] sm:$0xff]
    %v1096 = vld [vmem:[%s1062 + $0x108] sm:$0xff]
    %v1097 = vld [vmem:[%s1062 + $0x110] sm:$0xff]
    %v1098 = vld [vmem:[%s1062 + $0x118] sm:$0xff]
    %v1099 = vld [vmem:[%s1062 + $0x120] sm:$0xff]
    %v1100 = vld [vmem:[%s1062 + $0x128] sm:$0xff]
    %v1101 = vld [vmem:[%s1062 + $0x130] sm:$0xff]
    %v1102 = vld [vmem:[%s1062 + $0x138] sm:$0xff]
    %v1103 = vld [vmem:[%s1062 + $0x140] sm:$0xff]
    %v1104 = vld [vmem:[%s1062 + $0x148] sm:$0xff]
    %v1105 = vld [vmem:[%s1062 + $0x150] sm:$0xff]
    %v1106 = vld [vmem:[%s1062 + $0x158] sm:$0xff]
    %v1107 = vld [vmem:[%s1062 + $0x160] sm:$0xff]
    %v1108 = vld [vmem:[%s1062 + $0x168] sm:$0xff]
    %v1109 = vld [vmem:[%s1062 + $0x170] sm:$0xff]
    %v1110 = vld [vmem:[%s1062 + $0x178] sm:$0xff]
    %v1111 = vld [vmem:[%s1062 + $0x180] sm:$0xff]
    %v1112 = vld [vmem:[%s1062 + $0x188] sm:$0xff]
    %v1113 = vld [vmem:[%s1062 + $0x190] sm:$0xff]
    %v1114 = vld [vmem:[%s1062 + $0x198] sm:$0xff]
    %v1115 = vld [vmem:[%s1062 + $0x1a0] sm:$0xff]
    %v1116 = vld [vmem:[%s1062 + $0x1a8] sm:$0xff]
    %v1117 = vld [vmem:[%s1062 + $0x1b0] sm:$0xff]
    %v1118 = vld [vmem:[%s1062 + $0x1b8] sm:$0xff]
    %v1119 = vld [vmem:[%s1062 + $0x1c0] sm:$0xff]
    %v1120 = vld [vmem:[%s1062 + $0x1c8] sm:$0xff]
    %v1121 = vld [vmem:[%s1062 + $0x1d0] sm:$0xff]
    %v1122 = vld [vmem:[%s1062 + $0x1d8] sm:$0xff]
    %v1123 = vld [vmem:[%s1062 + $0x1e0] sm:$0xff]
    %v1124 = vld [vmem:[%s1062 + $0x1e8] sm:$0xff]
    %v1125 = vld [vmem:[%s1062 + $0x1f0] sm:$0xff]
    %v1126 = vld [vmem:[%s1062 + $0x1f8] sm:$0xff]
    %s1127 = scalar_lea.vmem [#allocation13], 8
    %v1128 = vld [vmem:[%s1127] sm:$0x3]
    %v1130 = vlaneseq
    %v1131 = vshrl.u32 %v1130, 7
    %v1132 = vsub.s32 0, %v1131
    %v1133 = vrot.slane %v1128, %v1132
    %v1134 = vlaneseq
    %v1135 = vshrl.u32 %v1134, 7
    %v1136 = vsub.s32 1, %v1135
    %v1137 = vrot.slane %v1128, %v1136
    %1140 = vmatprep.subr.mxu0 %v1064
    %1141 = vmatpush1.msra.mxu0 %v1063
    %1142 = vmatprep.subr.mxu0 %v1066
    %1143 = vmatpush1.msra.mxu0 %v1065
    %1144 = vmatprep.subr.mxu0 %v1068
    %1145 = vmatpush1.msra.mxu0 %v1067
    %1146 = vmatprep.subr.mxu0 %v1070
    %1147 = vmatpush1.msra.mxu0 %v1069
    %1148 = vmatprep.subr.mxu0 %v1072
    %1149 = vmatpush1.msra.mxu0 %v1071
    %1150 = vmatprep.subr.mxu0 %v1074
    %1151 = vmatpush1.msra.mxu0 %v1073
    %1152 = vmatprep.subr.mxu0 %v1076
    %1153 = vmatpush1.msra.mxu0 %v1075
    %1154 = vmatprep.subr.mxu0 %v1078
    %1155 = vmatpush1.msra.mxu0 %v1077
    %1156 = vmatprep.subr.mxu0 %v1080
    %1157 = vmatpush1.msra.mxu0 %v1079
    %1158 = vmatprep.subr.mxu0 %v1082
    %1159 = vmatpush1.msra.mxu0 %v1081
    %1160 = vmatprep.subr.mxu0 %v1084
    %1161 = vmatpush1.msra.mxu0 %v1083
    %1162 = vmatprep.subr.mxu0 %v1086
    %1163 = vmatpush1.msra.mxu0 %v1085
    %1164 = vmatprep.subr.mxu0 %v1088
    %1165 = vmatpush1.msra.mxu0 %v1087
    %1166 = vmatprep.subr.mxu0 %v1090
    %1167 = vmatpush1.msra.mxu0 %v1089
    %1168 = vmatprep.subr.mxu0 %v1092
    %1169 = vmatpush1.msra.mxu0 %v1091
    %1170 = vmatprep.subr.mxu0 %v1094
    %1171 = vmatpush1.msra.mxu0 %v1093
    %1172 = vmatprep.subr.mxu0 %v1096
    %1173 = vmatpush1.msra.mxu0 %v1095
    %1174 = vmatprep.subr.mxu0 %v1098
    %1175 = vmatpush1.msra.mxu0 %v1097
    %1176 = vmatprep.subr.mxu0 %v1100
    %1177 = vmatpush1.msra.mxu0 %v1099
    %1178 = vmatprep.subr.mxu0 %v1102
    %1179 = vmatpush1.msra.mxu0 %v1101
    %1180 = vmatprep.subr.mxu0 %v1104
    %1181 = vmatpush1.msra.mxu0 %v1103
    %1182 = vmatprep.subr.mxu0 %v1106
    %1183 = vmatpush1.msra.mxu0 %v1105
    %1184 = vmatprep.subr.mxu0 %v1108
    %1185 = vmatpush1.msra.mxu0 %v1107
    %1186 = vmatprep.subr.mxu0 %v1110
    %1187 = vmatpush1.msra.mxu0 %v1109
    %1188 = vmatprep.subr.mxu0 %v1112
    %1189 = vmatpush1.msra.mxu0 %v1111
    %1190 = vmatprep.subr.mxu0 %v1114
    %1191 = vmatpush1.msra.mxu0 %v1113
    %1192 = vmatprep.subr.mxu0 %v1116
    %1193 = vmatpush1.msra.mxu0 %v1115
    %1194 = vmatprep.subr.mxu0 %v1118
    %1195 = vmatpush1.msra.mxu0 %v1117
    %1196 = vmatprep.subr.mxu0 %v1120
    %1197 = vmatpush1.msra.mxu0 %v1119
    %1198 = vmatprep.subr.mxu0 %v1122
    %1199 = vmatpush1.msra.mxu0 %v1121
    %1200 = vmatprep.subr.mxu0 %v1124
    %1201 = vmatpush1.msra.mxu0 %v1123
    %1202 = vmatprep.subr.mxu0 %v1126
    %1203 = vmatpush1.msra.mxu0 %v1125
    %1204 = vmatprep.mubr.f32.mxu0 %v1061
    %1205 = vmatmul.mubr.f32.gmra.mrb[0].mxu0 %v1060
    %v1206 = vpop.f32.mrb[0].mxu0
    %v1207 = vadd.f32 %v1133, %v1206
    %v1208 = vpop.f32.mrb[0].mxu0
    %v1209 = vadd.f32 %v1137, %v1208
    %1210 = vdwg.mxu0
    %v1211 = vmax.f32 %v1207, 0.0
    %v1212 = vmax.f32 %v1209, 0.0
    %s1213 = scalar_lea.vmem [#allocation11], 2560
    %v1214 = vld [vmem:[%s1213] sm:$0xff]
    %v1215 = vld [vmem:[%s1213 + $0x8] sm:$0xff]
    %v1216 = vld [vmem:[%s1213 + $0x10] sm:$0xff]
    %v1217 = vld [vmem:[%s1213 + $0x18] sm:$0xff]
    %v1218 = vld [vmem:[%s1213 + $0x20] sm:$0xff]
    %v1219 = vld [vmem:[%s1213 + $0x28] sm:$0xff]
    %v1220 = vld [vmem:[%s1213 + $0x30] sm:$0xff]
    %v1221 = vld [vmem:[%s1213 + $0x38] sm:$0xff]
    %v1222 = vld [vmem:[%s1213 + $0x40] sm:$0xff]
    %v1223 = vld [vmem:[%s1213 + $0x48] sm:$0xff]
    %v1224 = vld [vmem:[%s1213 + $0x50] sm:$0xff]
    %v1225 = vld [vmem:[%s1213 + $0x58] sm:$0xff]
    %v1226 = vld [vmem:[%s1213 + $0x60] sm:$0xff]
    %v1227 = vld [vmem:[%s1213 + $0x68] sm:$0xff]
    %v1228 = vld [vmem:[%s1213 + $0x70] sm:$0xff]
    %v1229 = vld [vmem:[%s1213 + $0x78] sm:$0xff]
    %v1230 = vld [vmem:[%s1213 + $0x80] sm:$0xff]
    %v1231 = vld [vmem:[%s1213 + $0x88] sm:$0xff]
    %v1232 = vld [vmem:[%s1213 + $0x90] sm:$0xff]
    %v1233 = vld [vmem:[%s1213 + $0x98] sm:$0xff]
    %v1234 = vld [vmem:[%s1213 + $0xa0] sm:$0xff]
    %v1235 = vld [vmem:[%s1213 + $0xa8] sm:$0xff]
    %v1236 = vld [vmem:[%s1213 + $0xb0] sm:$0xff]
    %v1237 = vld [vmem:[%s1213 + $0xb8] sm:$0xff]
    %v1238 = vld [vmem:[%s1213 + $0xc0] sm:$0xff]
    %v1239 = vld [vmem:[%s1213 + $0xc8] sm:$0xff]
    %v1240 = vld [vmem:[%s1213 + $0xd0] sm:$0xff]
    %v1241 = vld [vmem:[%s1213 + $0xd8] sm:$0xff]
    %v1242 = vld [vmem:[%s1213 + $0xe0] sm:$0xff]
    %v1243 = vld [vmem:[%s1213 + $0xe8] sm:$0xff]
    %v1244 = vld [vmem:[%s1213 + $0xf0] sm:$0xff]
    %v1245 = vld [vmem:[%s1213 + $0xf8] sm:$0xff]
    %v1246 = vld [vmem:[%s1213 + $0x100] sm:$0xff]
    %v1247 = vld [vmem:[%s1213 + $0x108] sm:$0xff]
    %v1248 = vld [vmem:[%s1213 + $0x110] sm:$0xff]
    %v1249 = vld [vmem:[%s1213 + $0x118] sm:$0xff]
    %v1250 = vld [vmem:[%s1213 + $0x120] sm:$0xff]
    %v1251 = vld [vmem:[%s1213 + $0x128] sm:$0xff]
    %v1252 = vld [vmem:[%s1213 + $0x130] sm:$0xff]
    %v1253 = vld [vmem:[%s1213 + $0x138] sm:$0xff]
    %v1254 = vld [vmem:[%s1213 + $0x140] sm:$0xff]
    %v1255 = vld [vmem:[%s1213 + $0x148] sm:$0xff]
    %v1256 = vld [vmem:[%s1213 + $0x150] sm:$0xff]
    %v1257 = vld [vmem:[%s1213 + $0x158] sm:$0xff]
    %v1258 = vld [vmem:[%s1213 + $0x160] sm:$0xff]
    %v1259 = vld [vmem:[%s1213 + $0x168] sm:$0xff]
    %v1260 = vld [vmem:[%s1213 + $0x170] sm:$0xff]
    %v1261 = vld [vmem:[%s1213 + $0x178] sm:$0xff]
    %v1262 = vld [vmem:[%s1213 + $0x180] sm:$0xff]
    %v1263 = vld [vmem:[%s1213 + $0x188] sm:$0xff]
    %v1264 = vld [vmem:[%s1213 + $0x190] sm:$0xff]
    %v1265 = vld [vmem:[%s1213 + $0x198] sm:$0xff]
    %v1266 = vld [vmem:[%s1213 + $0x1a0] sm:$0xff]
    %v1267 = vld [vmem:[%s1213 + $0x1a8] sm:$0xff]
    %v1268 = vld [vmem:[%s1213 + $0x1b0] sm:$0xff]
    %v1269 = vld [vmem:[%s1213 + $0x1b8] sm:$0xff]
    %v1270 = vld [vmem:[%s1213 + $0x1c0] sm:$0xff]
    %v1271 = vld [vmem:[%s1213 + $0x1c8] sm:$0xff]
    %v1272 = vld [vmem:[%s1213 + $0x1d0] sm:$0xff]
    %v1273 = vld [vmem:[%s1213 + $0x1d8] sm:$0xff]
    %v1274 = vld [vmem:[%s1213 + $0x1e0] sm:$0xff]
    %v1275 = vld [vmem:[%s1213 + $0x1e8] sm:$0xff]
    %v1276 = vld [vmem:[%s1213 + $0x1f0] sm:$0xff]
    %v1277 = vld [vmem:[%s1213 + $0x1f8] sm:$0xff]
    %s1278 = scalar_lea.vmem [#allocation13], 10
    %v1279 = vld [vmem:[%s1278] sm:$0x3]
    %v1281 = vlaneseq
    %v1282 = vshrl.u32 %v1281, 7
    %v1283 = vsub.s32 0, %v1282
    %v1284 = vrot.slane %v1279, %v1283
    %v1285 = vlaneseq
    %v1286 = vshrl.u32 %v1285, 7
    %v1287 = vsub.s32 1, %v1286
    %v1288 = vrot.slane %v1279, %v1287
    %1291 = vmatprep.subr.mxu0 %v1215
    %1292 = vmatpush1.msra.mxu0 %v1214
    %1293 = vmatprep.subr.mxu0 %v1217
    %1294 = vmatpush1.msra.mxu0 %v1216
    %1295 = vmatprep.subr.mxu0 %v1219
    %1296 = vmatpush1.msra.mxu0 %v1218
    %1297 = vmatprep.subr.mxu0 %v1221
    %1298 = vmatpush1.msra.mxu0 %v1220
    %1299 = vmatprep.subr.mxu0 %v1223
    %1300 = vmatpush1.msra.mxu0 %v1222
    %1301 = vmatprep.subr.mxu0 %v1225
    %1302 = vmatpush1.msra.mxu0 %v1224
    %1303 = vmatprep.subr.mxu0 %v1227
    %1304 = vmatpush1.msra.mxu0 %v1226
    %1305 = vmatprep.subr.mxu0 %v1229
    %1306 = vmatpush1.msra.mxu0 %v1228
    %1307 = vmatprep.subr.mxu0 %v1231
    %1308 = vmatpush1.msra.mxu0 %v1230
    %1309 = vmatprep.subr.mxu0 %v1233
    %1310 = vmatpush1.msra.mxu0 %v1232
    %1311 = vmatprep.subr.mxu0 %v1235
    %1312 = vmatpush1.msra.mxu0 %v1234
    %1313 = vmatprep.subr.mxu0 %v1237
    %1314 = vmatpush1.msra.mxu0 %v1236
    %1315 = vmatprep.subr.mxu0 %v1239
    %1316 = vmatpush1.msra.mxu0 %v1238
    %1317 = vmatprep.subr.mxu0 %v1241
    %1318 = vmatpush1.msra.mxu0 %v1240
    %1319 = vmatprep.subr.mxu0 %v1243
    %1320 = vmatpush1.msra.mxu0 %v1242
    %1321 = vmatprep.subr.mxu0 %v1245
    %1322 = vmatpush1.msra.mxu0 %v1244
    %1323 = vmatprep.subr.mxu0 %v1247
    %1324 = vmatpush1.msra.mxu0 %v1246
    %1325 = vmatprep.subr.mxu0 %v1249
    %1326 = vmatpush1.msra.mxu0 %v1248
    %1327 = vmatprep.subr.mxu0 %v1251
    %1328 = vmatpush1.msra.mxu0 %v1250
    %1329 = vmatprep.subr.mxu0 %v1253
    %1330 = vmatpush1.msra.mxu0 %v1252
    %1331 = vmatprep.subr.mxu0 %v1255
    %1332 = vmatpush1.msra.mxu0 %v1254
    %1333 = vmatprep.subr.mxu0 %v1257
    %1334 = vmatpush1.msra.mxu0 %v1256
    %1335 = vmatprep.subr.mxu0 %v1259
    %1336 = vmatpush1.msra.mxu0 %v1258
    %1337 = vmatprep.subr.mxu0 %v1261
    %1338 = vmatpush1.msra.mxu0 %v1260
    %1339 = vmatprep.subr.mxu0 %v1263
    %1340 = vmatpush1.msra.mxu0 %v1262
    %1341 = vmatprep.subr.mxu0 %v1265
    %1342 = vmatpush1.msra.mxu0 %v1264
    %1343 = vmatprep.subr.mxu0 %v1267
    %1344 = vmatpush1.msra.mxu0 %v1266
    %1345 = vmatprep.subr.mxu0 %v1269
    %1346 = vmatpush1.msra.mxu0 %v1268
    %1347 = vmatprep.subr.mxu0 %v1271
    %1348 = vmatpush1.msra.mxu0 %v1270
    %1349 = vmatprep.subr.mxu0 %v1273
    %1350 = vmatpush1.msra.mxu0 %v1272
    %1351 = vmatprep.subr.mxu0 %v1275
    %1352 = vmatpush1.msra.mxu0 %v1274
    %1353 = vmatprep.subr.mxu0 %v1277
    %1354 = vmatpush1.msra.mxu0 %v1276
    %1355 = vmatprep.mubr.f32.mxu0 %v1212
    %1356 = vmatmul.mubr.f32.gmra.mrb[0].mxu0 %v1211
    %v1357 = vpop.f32.mrb[0].mxu0
    %v1358 = vadd.f32 %v1284, %v1357
    %v1359 = vpop.f32.mrb[0].mxu0
    %v1360 = vadd.f32 %v1288, %v1359
    %1361 = vdwg.mxu0
    %v1362 = vmax.f32 %v1358, 0.0
    %v1363 = vmax.f32 %v1360, 0.0
    %v1364 = vld [vmem:[#allocation14] sm:$0xff]
    %v1365 = vld [vmem:[#allocation14 + $0x8] sm:$0xff]
    %v1366 = vld [vmem:[#allocation14 + $0x10] sm:$0xff]
    %v1367 = vld [vmem:[#allocation14 + $0x18] sm:$0xff]
    %v1368 = vld [vmem:[#allocation14 + $0x20] sm:$0xff]
    %v1369 = vld [vmem:[#allocation14 + $0x28] sm:$0xff]
    %v1370 = vld [vmem:[#allocation14 + $0x30] sm:$0xff]
    %v1371 = vld [vmem:[#allocation14 + $0x38] sm:$0xff]
    %v1372 = vld [vmem:[#allocation14 + $0x40] sm:$0xff]
    %v1373 = vld [vmem:[#allocation14 + $0x48] sm:$0xff]
    %v1374 = vld [vmem:[#allocation14 + $0x50] sm:$0xff]
    %v1375 = vld [vmem:[#allocation14 + $0x58] sm:$0xff]
    %v1376 = vld [vmem:[#allocation14 + $0x60] sm:$0xff]
    %v1377 = vld [vmem:[#allocation14 + $0x68] sm:$0xff]
    %v1378 = vld [vmem:[#allocation14 + $0x70] sm:$0xff]
    %v1379 = vld [vmem:[#allocation14 + $0x78] sm:$0xff]
    %v1380 = vld [vmem:[#allocation14 + $0x80] sm:$0xff]
    %v1381 = vld [vmem:[#allocation14 + $0x88] sm:$0xff]
    %v1382 = vld [vmem:[#allocation14 + $0x90] sm:$0xff]
    %v1383 = vld [vmem:[#allocation14 + $0x98] sm:$0xff]
    %v1384 = vld [vmem:[#allocation14 + $0xa0] sm:$0xff]
    %v1385 = vld [vmem:[#allocation14 + $0xa8] sm:$0xff]
    %v1386 = vld [vmem:[#allocation14 + $0xb0] sm:$0xff]
    %v1387 = vld [vmem:[#allocation14 + $0xb8] sm:$0xff]
    %v1388 = vld [vmem:[#allocation14 + $0xc0] sm:$0xff]
    %v1389 = vld [vmem:[#allocation14 + $0xc8] sm:$0xff]
    %v1390 = vld [vmem:[#allocation14 + $0xd0] sm:$0xff]
    %v1391 = vld [vmem:[#allocation14 + $0xd8] sm:$0xff]
    %v1392 = vld [vmem:[#allocation14 + $0xe0] sm:$0xff]
    %v1393 = vld [vmem:[#allocation14 + $0xe8] sm:$0xff]
    %v1394 = vld [vmem:[#allocation14 + $0xf0] sm:$0xff]
    %v1395 = vld [vmem:[#allocation14 + $0xf8] sm:$0xff]
    %v1396 = vld [vmem:[#allocation16] sm:$0x1]
    %v1398 = vlaneseq
    %v1399 = vshrl.u32 %v1398, 7
    %v1400 = vsub.s32 0, %v1399
    %v1401 = vrot.slane %v1396, %v1400
    %1403 = vmatprep.subr.mxu0 0.0
    %1404 = vmatpush1.msra.mxu0 %v1364
    %1405 = vmatprep.subr.mxu0 0.0
    %1406 = vmatpush1.msra.mxu0 %v1365
    %1407 = vmatprep.subr.mxu0 0.0
    %1408 = vmatpush1.msra.mxu0 %v1366
    %1409 = vmatprep.subr.mxu0 0.0
    %1410 = vmatpush1.msra.mxu0 %v1367
    %1411 = vmatprep.subr.mxu0 0.0
    %1412 = vmatpush1.msra.mxu0 %v1368
    %1413 = vmatprep.subr.mxu0 0.0
    %1414 = vmatpush1.msra.mxu0 %v1369
    %1415 = vmatprep.subr.mxu0 0.0
    %1416 = vmatpush1.msra.mxu0 %v1370
    %1417 = vmatprep.subr.mxu0 0.0
    %1418 = vmatpush1.msra.mxu0 %v1371
    %1419 = vmatprep.subr.mxu0 0.0
    %1420 = vmatpush1.msra.mxu0 %v1372
    %1421 = vmatprep.subr.mxu0 0.0
    %1422 = vmatpush1.msra.mxu0 %v1373
    %1423 = vmatprep.subr.mxu0 0.0
    %1424 = vmatpush1.msra.mxu0 %v1374
    %1425 = vmatprep.subr.mxu0 0.0
    %1426 = vmatpush1.msra.mxu0 %v1375
    %1427 = vmatprep.subr.mxu0 0.0
    %1428 = vmatpush1.msra.mxu0 %v1376
    %1429 = vmatprep.subr.mxu0 0.0
    %1430 = vmatpush1.msra.mxu0 %v1377
    %1431 = vmatprep.subr.mxu0 0.0
    %1432 = vmatpush1.msra.mxu0 %v1378
    %1433 = vmatprep.subr.mxu0 0.0
    %1434 = vmatpush1.msra.mxu0 %v1379
    %1435 = vmatprep.subr.mxu0 0.0
    %1436 = vmatpush1.msra.mxu0 %v1380
    %1437 = vmatprep.subr.mxu0 0.0
    %1438 = vmatpush1.msra.mxu0 %v1381
    %1439 = vmatprep.subr.mxu0 0.0
    %1440 = vmatpush1.msra.mxu0 %v1382
    %1441 = vmatprep.subr.mxu0 0.0
    %1442 = vmatpush1.msra.mxu0 %v1383
    %1443 = vmatprep.subr.mxu0 0.0
    %1444 = vmatpush1.msra.mxu0 %v1384
    %1445 = vmatprep.subr.mxu0 0.0
    %1446 = vmatpush1.msra.mxu0 %v1385
    %1447 = vmatprep.subr.mxu0 0.0
    %1448 = vmatpush1.msra.mxu0 %v1386
    %1449 = vmatprep.subr.mxu0 0.0
    %1450 = vmatpush1.msra.mxu0 %v1387
    %1451 = vmatprep.subr.mxu0 0.0
    %1452 = vmatpush1.msra.mxu0 %v1388
    %1453 = vmatprep.subr.mxu0 0.0
    %1454 = vmatpush1.msra.mxu0 %v1389
    %1455 = vmatprep.subr.mxu0 0.0
    %1456 = vmatpush1.msra.mxu0 %v1390
    %1457 = vmatprep.subr.mxu0 0.0
    %1458 = vmatpush1.msra.mxu0 %v1391
    %1459 = vmatprep.subr.mxu0 0.0
    %1460 = vmatpush1.msra.mxu0 %v1392
    %1461 = vmatprep.subr.mxu0 0.0
    %1462 = vmatpush1.msra.mxu0 %v1393
    %1463 = vmatprep.subr.mxu0 0.0
    %1464 = vmatpush1.msra.mxu0 %v1394
    %1465 = vmatprep.subr.mxu0 0.0
    %1466 = vmatpush1.msra.mxu0 %v1395
    %1467 = vmatprep.mubr.f32.mxu0 %v1363
    %1468 = vmatmul.mubr.f32.gmra.mrb[0].mxu0 %v1362
    %v1469 = vpop.f32.mrb[0].mxu0
    %v1470 = vadd.f32 %v1401, %v1469
    %v1471 = vpop.f32.mrb[0].mxu0
    %1472 = vdwg.mxu0
    %1473 = vst [vmem:[#allocation17] sm:$0xff] %v1470
    // Predicated region
    $region86: #{tpu_custom_call.1} parent=1 // pred_check
      _
    $region87: #{tpu_custom_call.1} parent=1 // pred_check_branch
      %1475 = sbr.rel (0) target = $region89
    $region88: #{tpu_custom_call.1} parent=1 // pred_region
      %s1477 = ssub.s32 128, 128
      %1478 = vsyncadd [#allocation4], %s1477
      %s1480 = sshll.u32 [#allocation17], 4
      %s1481 = int_to_ptr.vmem [resolvable:$true] %s1480
      %1483 = dma.vmem_to_hbm [thread:$0]  %s1481, 128, %s12, [#allocation4]
    $region89: #{tpu_custom_call.1} parent=1 // pred_fallthru
      _
    // Predicated region
    $region90: #{tpu_custom_call.1} parent=1 // pred_check
      _
    $region91: #{tpu_custom_call.1} parent=1 // pred_check_branch
      %1485 = sbr.rel (0) target = $region93
    $region92: #{tpu_custom_call.1} parent=1 // pred_region
      %1486 = dma.done [#allocation4], 128
    $region93: #{tpu_custom_call.1} parent=1 // pred_fallthru
      _
    %1487 = vsyncpa [#allocation3], 1
    %1488 = vsyncpa [#allocation6], 1
    %1489 = vsyncpa [#allocation9], 1
    %1490 = vsyncpa [#allocation12], 1
    %1491 = vsyncpa [#allocation15], 1
    %1492 = vsyncpa [#allocation4], 1

</llo_original>
